<compile_context>
chip_gen: v7x
topology: tpu7x:2x2x1
jax: 0.10.0
libtpu: 0.0.40
codegen_flags: <defaults>
</compile_context>

<pallas_src>
import functools

import jax
import jax.numpy as jnp
from jax.experimental import pallas as pl
from jax.experimental.pallas import tpu as pltpu

EPS = 1e-5  # PyTorch nn.LayerNorm default


def _round_up(x, m):
    return (x + m - 1) // m * m


# --------------------------------------------------------------------------
# Kernel
# --------------------------------------------------------------------------

def _critic_kernel(s_ref,      # (TB, inSize)        bf16 activation tile
                   a_ref,      # (TB, nActions)      bf16 activation tile
                   wfs_ref,    # (inSize, Hp)        bf16  fc weight (state rows)
                   wfa_ref,    # (nActions, Hp)      bf16  fc weight (action rows)
                   bfc_ref,    # (1, Hp)             f32
                   wl_ref,     # (nHidden, Hp, Hp)   bf16  (LayerNorm gamma folded in)
                   bl_ref,     # (nHidden, 1, Hp)    f32   (LayerNorm beta folded in)
                   wv_ref,     # (1, Hp)             f32
                   bv_ref,     # (1, 1)              f32
                   out_ref,    # (1, TB)             f32   lane-dense value row
                   *, h_true, unroll_layers):
    n_hidden = wl_ref.shape[0]
    inv_h = jnp.float32(1.0 / h_true)

    # fc + relu  (split matmul == matmul of the concatenated input)
    h = (jnp.dot(s_ref[...], wfs_ref[...], preferred_element_type=jnp.float32)
         + jnp.dot(a_ref[...], wfa_ref[...], preferred_element_type=jnp.float32)
         + bfc_ref[...])
    h = jnp.maximum(h, 0.0)

    def layer_step(i, h):
        # Single-pass LN stats over the TRUE feature count. Padded lanes of h
        # are exactly zero, so full-lane sums are already correct.
        # (E[x^2]-E[x]^2 is less robust than two-pass LN for huge activations;
        # the max(.,0) clamp guards it — fine in f32 for post-ReLU scales.)
        s1 = jnp.sum(h, axis=-1, keepdims=True)
        s2 = jnp.sum(h * h, axis=-1, keepdims=True)
        mean = s1 * inv_h
        var = jnp.maximum(s2 * inv_h - mean * mean, 0.0)
        xn = (h - mean) * jax.lax.rsqrt(var + EPS)
        # gamma/beta live inside wl/bl; padded ROWS of wl are zero so the
        # non-zero padded lanes of xn contribute nothing.
        h_new = jnp.dot(xn.astype(jnp.bfloat16), wl_ref[i],
                        preferred_element_type=jnp.float32) + bl_ref[i]
        return jnp.maximum(h_new, 0.0)

    if unroll_layers:
        for i in range(n_hidden):
            h = layer_step(i, h)
    else:
        # Bounds live ranges / code size when nHidden is large; wl_ref[i] with
        # a traced index is a dynamic slice on the leading (untiled) axis.
        h = jax.lax.fori_loop(0, n_hidden, layer_step, h)

    # Value head emitted lane-dense: (1,Hp) @ (TB,Hp)^T on the MXU -> (1, TB),
    # stored as full 128-lane vregs (no masked vst.msk column stores).
    v = jnp.einsum("oh,bh->ob", wv_ref[...], h,
                   preferred_element_type=jnp.float32) + bv_ref[...]
    out_ref[...] = v.astype(out_ref.dtype)


# --------------------------------------------------------------------------
# Wrapper
# --------------------------------------------------------------------------

def _pick_batch_tile(B, block_b):
    """Batch tile TB and padded batch Bp.

    TB is a multiple of 8.  When the batch is split into several tiles, TB is
    a multiple of 128 so the lane-dense (1, TB) output block stays aligned,
    and there are >= 2 grid blocks once B > 128 (feeds both v7x TensorCores).
    For B <= 128 a single full block is used: at that size the kernel is
    per-grid-step overhead bound and splitting would only add overhead.
    """
    bp8 = _round_up(B, 8)
    if bp8 <= 128:
        return bp8, bp8                    # single block == whole (padded) batch
    tb = min(_round_up(block_b, 128), _round_up(pl.cdiv(B, 2), 128))
    return tb, _round_up(B, tb)


def _vmem_limit_bytes(tb, in_size, n_actions, hp, n_hidden):
    """Explicit scoped-VMEM budget: resident weights (counted at 2 buffers in
    case single-buffering is unavailable) + double-buffered activation tiles +
    f32 working set, with 2x headroom, clamped to [32 MiB, 64 MiB] so the same
    setting is legal on v5e/v6e (128 MiB physical) and v7x (64 MiB)."""
    bf16, f32 = 2, 4
    weights = ((in_size + n_actions) * hp * bf16        # split fc weight
               + hp * f32                               # fc bias
               + n_hidden * hp * hp * bf16              # folded layer weights
               + n_hidden * hp * f32                    # folded layer biases
               + hp * f32 + f32)                        # value head
    acts = 2 * tb * (in_size + n_actions) * bf16        # double-buffered inputs
    outs = 2 * tb * f32                                 # double-buffered out row
    work = 8 * tb * hp * f32                            # h / xn / temporaries
    est = 2 * weights + acts + outs + work
    # TODO(synk): if n_hidden*hp*hp*2B (resident layer weights) grows past
    # ~half of v7x's 64 MiB VMEM, switch w_layers to per-layer streaming
    # (extra grid axis or pltpu.emit_pipeline over the layer index) instead of
    # full residency; all-resident is the right call at these sizes.
    return int(min(max(2 * est, 32 * 2**20), 64 * 2**20))


def critic_forward(state, action, kp, *, block_b=512):
    """state: (B, inSize) f32, action: (B, nActions) f32 -> (B, 1) f32.

    block_b is the batch-tile target; sweep 512-1024 on v5e/v6e (128 MiB VMEM)
    and 256-512 on v7x (64 MiB).
    """
    B, in_size = state.shape
    n_actions = action.shape[1]
    hp = kp["w_fc_s"].shape[1]
    n_hidden = kp["w_layers"].shape[0]

    tb, bp = _pick_batch_tile(B, block_b)
    n_blocks = bp // tb

    # Cast the only streamed operands to bf16 once here (ideally they would be
    # stored bf16 upstream): halves the per-step DMA and removes two in-kernel
    # cast passes.  All LN / elementwise math stays f32 inside the kernel.
    state = state.astype(jnp.bfloat16)
    action = action.astype(jnp.bfloat16)
    if bp != B:
        state = jnp.pad(state, ((0, bp - B), (0, 0)))
        action = jnp.pad(action, ((0, bp - B), (0, 0)))

    vmem_limit = _vmem_limit_bytes(tb, in_size, n_actions, hp, n_hidden)
    kern = functools.partial(_critic_kernel, h_true=kp["h_true"],
                             unroll_layers=(n_hidden <= 4))

    def build(single_buffer_weights):
        def wspec(shape, imap):
            # Weight blocks never change across the grid: single-buffer them
            # (pure VMEM saving) when the JAX build supports per-operand
            # buffer counts.
            if single_buffer_weights:
                return pl.BlockSpec(shape, imap, pipeline_mode=pl.Buffered(1))
            return pl.BlockSpec(shape, imap)

        grid_spec = pltpu.PrefetchScalarGridSpec(
            num_scalar_prefetch=0,
            grid=(n_blocks,),
            in_specs=[
                pl.BlockSpec((tb, in_size), lambda i: (i, 0)),      # state tile
                pl.BlockSpec((tb, n_actions), lambda i: (i, 0)),    # action tile
                wspec((in_size, hp), lambda i: (0, 0)),             # resident weights
                wspec((n_actions, hp), lambda i: (0, 0)),
                wspec((1, hp), lambda i: (0, 0)),
                wspec((n_hidden, hp, hp), lambda i: (0, 0, 0)),
                wspec((n_hidden, 1, hp), lambda i: (0, 0, 0)),
                wspec((1, hp), lambda i: (0, 0)),
                wspec((1, 1), lambda i: (0, 0)),
            ],
            # Lane-dense output: one (1, TB) row per grid step into a (1, Bp)
            # slab.  TB is either a multiple of 128 or equal to Bp, so the
            # block is always lane-aligned.
            out_specs=pl.BlockSpec((1, tb), lambda i: (0, i)),
        )
        return pl.pallas_call(
            kern,
            out_shape=jax.ShapeDtypeStruct((1, bp), jnp.float32),
            grid_spec=grid_spec,
            compiler_params=pltpu.CompilerParams(
                dimension_semantics=("parallel",),      # megacore sharding on v7x
                vmem_limit_bytes=vmem_limit),
        )

    args = (state, action, kp["w_fc_s"], kp["w_fc_a"], kp["b_fc"],
            kp["w_layers"], kp["b_layers"], kp["w_value"], kp["b_value"])
    try:
        out = build(True)(*args)
    except Exception:
        # pl.Buffered(1) not accepted by this JAX/Mosaic build: fall back to
        # the default double-buffered weight specs (correct, more VMEM).
        out = build(False)(*args)

    return out[0, :B][:, None]


# --------------------------------------------------------------------------
# Parameter construction (PyTorch-like init) + offline prep for the kernel.
# --------------------------------------------------------------------------

def init_torch_params(key, in_size, n_hidden, h_size, n_actions):
    """PyTorch-semantics params (weights already transposed to (in, out))."""
    d_in = in_size + n_actions
    ks = jax.random.split(key, 8)

    def unif(k, shape, fan_in):
        bound = 1.0 / jnp.sqrt(jnp.float32(fan_in))
        return jax.random.uniform(k, shape, jnp.float32, -bound, bound)

    return {
        "w_fc": unif(ks[0], (d_in, h_size), d_in),
        "b_fc": unif(ks[1], (h_size,), d_in),
        "w_layers": unif(ks[2], (n_hidden, h_size, h_size), h_size),
        "b_layers": unif(ks[3], (n_hidden, h_size), h_size),
        # Non-trivial affine params so the gamma/beta fold is actually tested.
        "gammas": 1.0 + 0.1 * jax.random.normal(ks[4], (n_hidden, h_size), jnp.float32),
        "betas": 0.1 * jax.random.normal(ks[5], (n_hidden, h_size), jnp.float32),
        "w_value": unif(ks[6], (h_size, 1), h_size),
        "b_value": unif(ks[7], (1,), h_size),
    }


def _preferred_lane_multiple():
    """256-lane alignment on v6e/v7x (2x256^2 MXUs), 128 otherwise."""
    try:
        kind = jax.devices()[0].device_kind.lower()
    except Exception:
        return 128
    return 256 if ("v6" in kind or "v7" in kind) else 128


def prepare_kernel_params(p, in_size, *, lane=None):
    """Split fc weight, fold LayerNorm affine, zero-pad H to a lane multiple,
    and narrow matmul weights to bf16. Done once offline."""
    h = p["b_fc"].shape[0]
    if lane is None:
        # Keep 128 for small widths; align to 256 on v6e/v7x once H > 128.
        lane = _preferred_lane_multiple() if h > 128 else 128
    hp = _round_up(h, lane)
    pad_h = hp - h

    def pad_last(x):
        return jnp.pad(x, [(0, 0)] * (x.ndim - 1) + [(0, pad_h)])

    w_fc = p["w_fc"]
    # Fold gamma/beta into the following Linear:
    #   (xn*g + b) @ W = xn @ (g[:,None]*W) + b @ W
    wl = p["gammas"][:, :, None] * p["w_layers"]                       # (nH, H, H)
    bl = jnp.einsum("nh,nhk->nk", p["betas"], p["w_layers"]) + p["b_layers"]

    return {
        "w_fc_s": pad_last(w_fc[:in_size]).astype(jnp.bfloat16),        # (inSize, Hp)
        "w_fc_a": pad_last(w_fc[in_size:]).astype(jnp.bfloat16),        # (nActions, Hp)
        "b_fc": pad_last(p["b_fc"][None, :]),                           # (1, Hp) f32
        "w_layers": jnp.pad(wl, ((0, 0), (0, pad_h), (0, pad_h))).astype(jnp.bfloat16),
        "b_layers": pad_last(bl)[:, None, :],                           # (nH, 1, Hp) f32
        "w_value": pad_last(p["w_value"].reshape(1, h)),                # (1, Hp) f32
        "b_value": p["b_value"].reshape(1, 1),                          # (1, 1) f32
        "h_true": int(h),
    }


# --------------------------------------------------------------------------
# References for verification.
# --------------------------------------------------------------------------

def critic_reference_f32(state, action, p):
    """Faithful f32 PyTorch-semantics reference (concat, two-pass LN, affine)."""
    x = jnp.concatenate([state, action], axis=-1).astype(jnp.float32)
    h = jnp.maximum(x @ p["w_fc"] + p["b_fc"], 0.0)
    for i in range(p["w_layers"].shape[0]):
        mean = jnp.mean(h, axis=-1, keepdims=True)
        var = jnp.mean((h - mean) ** 2, axis=-1, keepdims=True)
        xn = (h - mean) / jnp.sqrt(var + EPS)
        xn = xn * p["gammas"][i] + p["betas"][i]
        h = jnp.maximum(xn @ p["w_layers"][i] + p["b_layers"][i], 0.0)
    return h @ p["w_value"] + p["b_value"]


def critic_reference_mirrored(state, action, kp):
    """Pure-JAX mirror of the kernel math (bf16 matmuls, folded LN, padded H)."""
    inv_h = 1.0 / kp["h_true"]
    s = state.astype(jnp.bfloat16)
    a = action.astype(jnp.bfloat16)
    h = (jnp.dot(s, kp["w_fc_s"], preferred_element_type=jnp.float32)
         + jnp.dot(a, kp["w_fc_a"], preferred_element_type=jnp.float32)
         + kp["b_fc"])
    h = jnp.maximum(h, 0.0)
    for i in range(kp["w_layers"].shape[0]):
        mean = jnp.sum(h, axis=-1, keepdims=True) * inv_h
        var = jnp.maximum(jnp.sum(h * h, axis=-1, keepdims=True) * inv_h
                          - mean * mean, 0.0)
        xn = (h - mean) * jax.lax.rsqrt(var + EPS)
        h = jnp.maximum(jnp.dot(xn.astype(jnp.bfloat16), kp["w_layers"][i],
                                preferred_element_type=jnp.float32)
                        + kp["b_layers"][i], 0.0)
    # Exact f32 value head (kernel uses an f32 MXU matmul for the same math).
    return jnp.sum(h * kp["w_value"], axis=-1, keepdims=True) + kp["b_value"]


if __name__ == "__main__":
    key = jax.random.PRNGKey(0)
    k1, k2 = jax.random.split(key)

    # ---- Config 1: small shapes consistent with the module's forward. ----
    B, IN_SIZE, N_ACTIONS, H_SIZE, N_HIDDEN = 8, 16, 4, 32, 2
    k_state, k_action, k_params = jax.random.split(k1, 3)
    state = jax.random.normal(k_state, (B, IN_SIZE), jnp.float32)
    action = jax.random.normal(k_action, (B, N_ACTIONS), jnp.float32)

    torch_params = init_torch_params(k_params, IN_SIZE, N_HIDDEN, H_SIZE, N_ACTIONS)
    kparams = prepare_kernel_params(torch_params, IN_SIZE)

    out = jax.block_until_ready(critic_forward(state, action, kparams))
    assert out.shape == (B, 1), out.shape

    ref_mirror = critic_reference_mirrored(state, action, kparams)
    assert jnp.allclose(out, ref_mirror, atol=5e-3, rtol=5e-3), (out, ref_mirror)

    ref_f32 = critic_reference_f32(state, action, torch_params)
    assert jnp.allclose(out, ref_f32, atol=5e-2, rtol=5e-2), (out, ref_f32)

    # ---- Config 2: exercises the multi-block grid, lane-dense multi-tile
    # output, fori_loop layer path and the wider (>=256) lane padding. ----
    B2, H2, NH2 = 300, 160, 6
    k_s2, k_a2, k_p2 = jax.random.split(k2, 3)
    state2 = jax.random.normal(k_s2, (B2, IN_SIZE), jnp.float32)
    action2 = jax.random.normal(k_a2, (B2, N_ACTIONS), jnp.float32)
    torch_params2 = init_torch_params(k_p2, IN_SIZE, NH2, H2, N_ACTIONS)
    kparams2 = prepare_kernel_params(torch_params2, IN_SIZE)

    out2 = jax.block_until_ready(critic_forward(state2, action2, kparams2))
    assert out2.shape == (B2, 1), out2.shape
    ref_mirror2 = critic_reference_mirrored(state2, action2, kparams2)
    assert jnp.allclose(out2, ref_mirror2, atol=1e-2, rtol=1e-2), (out2, ref_mirror2)

    print("KERNEL_OK")
</pallas_src>

<mosaic_0001>
module attributes {stable_mosaic.version = 11 : i64} {
  func.func @_critic_kernel(%arg0: i32, %arg1: memref<8x16xbf16, #tpu.memory_space<vmem>>, %arg2: memref<8x4xbf16, #tpu.memory_space<vmem>>, %arg3: memref<16x128xbf16, #tpu.memory_space<vmem>>, %arg4: memref<4x128xbf16, #tpu.memory_space<vmem>>, %arg5: memref<1x128xf32, #tpu.memory_space<vmem>>, %arg6: memref<2x128x128xbf16, #tpu.memory_space<vmem>>, %arg7: memref<2x1x128xf32, #tpu.memory_space<vmem>>, %arg8: memref<1x128xf32, #tpu.memory_space<vmem>>, %arg9: memref<1x1xf32, #tpu.memory_space<vmem>>, %arg10: memref<1x8xf32, #tpu.memory_space<vmem>>) attributes {dimension_semantics = [#tpu.dimension_semantics<parallel>], iteration_bounds = array<i64: 1>, scalar_prefetch = 0 : i64, scratch_operands = 0 : i64, tpu.core_type = #tpu.core_type<tc>, window_params = [{transform_indices = @transform_0, window_bounds = array<i64: 8, 16>}, {transform_indices = @transform_1, window_bounds = array<i64: 8, 4>}, {pipeline_mode = #tpu.pipeline_mode<synchronous>, transform_indices = @transform_2, window_bounds = array<i64: 16, 128>}, {pipeline_mode = #tpu.pipeline_mode<synchronous>, transform_indices = @transform_3, window_bounds = array<i64: 4, 128>}, {pipeline_mode = #tpu.pipeline_mode<synchronous>, transform_indices = @transform_4, window_bounds = array<i64: 1, 128>}, {pipeline_mode = #tpu.pipeline_mode<synchronous>, transform_indices = @transform_5, window_bounds = array<i64: 2, 128, 128>}, {pipeline_mode = #tpu.pipeline_mode<synchronous>, transform_indices = @transform_6, window_bounds = array<i64: 2, 1, 128>}, {pipeline_mode = #tpu.pipeline_mode<synchronous>, transform_indices = @transform_7, window_bounds = array<i64: 1, 128>}, {pipeline_mode = #tpu.pipeline_mode<synchronous>, transform_indices = @transform_8, window_bounds = array<i64: 1, 1>}, {transform_indices = @transform_9, window_bounds = array<i64: 1, 8>}]} {
    %c0 = arith.constant 0 : index
    %c0_0 = arith.constant 0 : index
    %0 = vector.load %arg1[%c0, %c0_0] : memref<8x16xbf16, #tpu.memory_space<vmem>>, vector<8x16xbf16>
    %c0_1 = arith.constant 0 : index
    %c0_2 = arith.constant 0 : index
    %1 = vector.load %arg3[%c0_1, %c0_2] : memref<16x128xbf16, #tpu.memory_space<vmem>>, vector<16x128xbf16>
    %cst = arith.constant dense<0.000000e+00> : vector<8x128xf32>
    %2 = tpu.matmul %0, %1, %cst {dimension_numbers = #tpu.dot_dimension_numbers<[1], [0], [0], [1], [0, 0, 1, 1], [], []>} : vector<8x16xbf16>, vector<16x128xbf16>, vector<8x128xf32> -> vector<8x128xf32>
    %c0_3 = arith.constant 0 : index
    %c0_4 = arith.constant 0 : index
    %3 = vector.load %arg2[%c0_3, %c0_4] : memref<8x4xbf16, #tpu.memory_space<vmem>>, vector<8x4xbf16>
    %c0_5 = arith.constant 0 : index
    %c0_6 = arith.constant 0 : index
    %4 = vector.load %arg4[%c0_5, %c0_6] : memref<4x128xbf16, #tpu.memory_space<vmem>>, vector<4x128xbf16>
    %cst_7 = arith.constant dense<0.000000e+00> : vector<8x128xf32>
    %5 = tpu.matmul %3, %4, %cst_7 {dimension_numbers = #tpu.dot_dimension_numbers<[1], [0], [0], [1], [0, 0, 1, 1], [], []>} : vector<8x4xbf16>, vector<4x128xbf16>, vector<8x128xf32> -> vector<8x128xf32>
    %6 = arith.addf %2, %5 : vector<8x128xf32>
    %c0_8 = arith.constant 0 : index
    %c0_9 = arith.constant 0 : index
    %7 = vector.load %arg5[%c0_8, %c0_9] : memref<1x128xf32, #tpu.memory_space<vmem>>, vector<1x128xf32>
    %8 = vector.broadcast %7 : vector<1x128xf32> to vector<8x128xf32>
    %9 = arith.addf %6, %8 : vector<8x128xf32>
    %cst_10 = arith.constant 0.000000e+00 : f32
    %10 = vector.broadcast %cst_10 : f32 to vector<8x128xf32>
    %11 = arith.maximumf %9, %10 : vector<8x128xf32>
    %cst_11 = arith.constant dense<0.000000e+00> : vector<8xf32>
    %12 = vector.multi_reduction <add>, %11, %cst_11 [1] : vector<8x128xf32> to vector<8xf32>
    %13 = vector.shape_cast %12 : vector<8xf32> to vector<8x1xf32>
    %14 = arith.mulf %11, %11 : vector<8x128xf32>
    %cst_12 = arith.constant dense<0.000000e+00> : vector<8xf32>
    %15 = vector.multi_reduction <add>, %14, %cst_12 [1] : vector<8x128xf32> to vector<8xf32>
    %16 = vector.shape_cast %15 : vector<8xf32> to vector<8x1xf32>
    %cst_13 = arith.constant 3.125000e-02 : f32
    %17 = vector.broadcast %cst_13 : f32 to vector<8x1xf32>
    %18 = arith.mulf %13, %17 : vector<8x1xf32>
    %cst_14 = arith.constant 3.125000e-02 : f32
    %19 = vector.broadcast %cst_14 : f32 to vector<8x1xf32>
    %20 = arith.mulf %16, %19 : vector<8x1xf32>
    %21 = arith.mulf %18, %18 : vector<8x1xf32>
    %22 = arith.subf %20, %21 : vector<8x1xf32>
    %cst_15 = arith.constant 0.000000e+00 : f32
    %23 = vector.broadcast %cst_15 : f32 to vector<8x1xf32>
    %24 = arith.maximumf %22, %23 : vector<8x1xf32>
    %25 = vector.broadcast %18 : vector<8x1xf32> to vector<8x128xf32>
    %26 = arith.subf %11, %25 : vector<8x128xf32>
    %cst_16 = arith.constant 9.99999974E-6 : f32
    %27 = vector.broadcast %cst_16 : f32 to vector<8x1xf32>
    %28 = arith.addf %24, %27 : vector<8x1xf32>
    %29 = math.rsqrt %28 : vector<8x1xf32>
    %30 = vector.broadcast %29 : vector<8x1xf32> to vector<8x128xf32>
    %31 = arith.mulf %26, %30 : vector<8x128xf32>
    %32 = arith.truncf %31 : vector<8x128xf32> to vector<8x128xbf16>
    %c0_17 = arith.constant 0 : index
    %c0_18 = arith.constant 0 : index
    %c0_19 = arith.constant 0 : index
    %33 = vector.load %arg6[%c0_17, %c0_18, %c0_19] : memref<2x128x128xbf16, #tpu.memory_space<vmem>>, vector<1x128x128xbf16>
    %34 = vector.shape_cast %33 : vector<1x128x128xbf16> to vector<128x128xbf16>
    %cst_20 = arith.constant dense<0.000000e+00> : vector<8x128xf32>
    %35 = tpu.matmul %32, %34, %cst_20 {dimension_numbers = #tpu.dot_dimension_numbers<[1], [0], [0], [1], [0, 0, 1, 1], [], []>} : vector<8x128xbf16>, vector<128x128xbf16>, vector<8x128xf32> -> vector<8x128xf32>
    %c0_21 = arith.constant 0 : index
    %c0_22 = arith.constant 0 : index
    %c0_23 = arith.constant 0 : index
    %36 = vector.load %arg7[%c0_21, %c0_22, %c0_23] : memref<2x1x128xf32, #tpu.memory_space<vmem>>, vector<1x1x128xf32>
    %37 = vector.shape_cast %36 : vector<1x1x128xf32> to vector<1x128xf32>
    %38 = vector.broadcast %37 : vector<1x128xf32> to vector<8x128xf32>
    %39 = arith.addf %35, %38 : vector<8x128xf32>
    %cst_24 = arith.constant 0.000000e+00 : f32
    %40 = vector.broadcast %cst_24 : f32 to vector<8x128xf32>
    %41 = arith.maximumf %39, %40 : vector<8x128xf32>
    %cst_25 = arith.constant dense<0.000000e+00> : vector<8xf32>
    %42 = vector.multi_reduction <add>, %41, %cst_25 [1] : vector<8x128xf32> to vector<8xf32>
    %43 = vector.shape_cast %42 : vector<8xf32> to vector<8x1xf32>
    %44 = arith.mulf %41, %41 : vector<8x128xf32>
    %cst_26 = arith.constant dense<0.000000e+00> : vector<8xf32>
    %45 = vector.multi_reduction <add>, %44, %cst_26 [1] : vector<8x128xf32> to vector<8xf32>
    %46 = vector.shape_cast %45 : vector<8xf32> to vector<8x1xf32>
    %cst_27 = arith.constant 3.125000e-02 : f32
    %47 = vector.broadcast %cst_27 : f32 to vector<8x1xf32>
    %48 = arith.mulf %43, %47 : vector<8x1xf32>
    %cst_28 = arith.constant 3.125000e-02 : f32
    %49 = vector.broadcast %cst_28 : f32 to vector<8x1xf32>
    %50 = arith.mulf %46, %49 : vector<8x1xf32>
    %51 = arith.mulf %48, %48 : vector<8x1xf32>
    %52 = arith.subf %50, %51 : vector<8x1xf32>
    %cst_29 = arith.constant 0.000000e+00 : f32
    %53 = vector.broadcast %cst_29 : f32 to vector<8x1xf32>
    %54 = arith.maximumf %52, %53 : vector<8x1xf32>
    %55 = vector.broadcast %48 : vector<8x1xf32> to vector<8x128xf32>
    %56 = arith.subf %41, %55 : vector<8x128xf32>
    %cst_30 = arith.constant 9.99999974E-6 : f32
    %57 = vector.broadcast %cst_30 : f32 to vector<8x1xf32>
    %58 = arith.addf %54, %57 : vector<8x1xf32>
    %59 = math.rsqrt %58 : vector<8x1xf32>
    %60 = vector.broadcast %59 : vector<8x1xf32> to vector<8x128xf32>
    %61 = arith.mulf %56, %60 : vector<8x128xf32>
    %62 = arith.truncf %61 : vector<8x128xf32> to vector<8x128xbf16>
    %c1 = arith.constant 1 : index
    %c0_31 = arith.constant 0 : index
    %c0_32 = arith.constant 0 : index
    %63 = vector.load %arg6[%c1, %c0_31, %c0_32] : memref<2x128x128xbf16, #tpu.memory_space<vmem>>, vector<1x128x128xbf16>
    %64 = vector.shape_cast %63 : vector<1x128x128xbf16> to vector<128x128xbf16>
    %cst_33 = arith.constant dense<0.000000e+00> : vector<8x128xf32>
    %65 = tpu.matmul %62, %64, %cst_33 {dimension_numbers = #tpu.dot_dimension_numbers<[1], [0], [0], [1], [0, 0, 1, 1], [], []>} : vector<8x128xbf16>, vector<128x128xbf16>, vector<8x128xf32> -> vector<8x128xf32>
    %c1_34 = arith.constant 1 : index
    %c0_35 = arith.constant 0 : index
    %c0_36 = arith.constant 0 : index
    %66 = vector.load %arg7[%c1_34, %c0_35, %c0_36] : memref<2x1x128xf32, #tpu.memory_space<vmem>>, vector<1x1x128xf32>
    %67 = vector.shape_cast %66 : vector<1x1x128xf32> to vector<1x128xf32>
    %68 = vector.broadcast %67 : vector<1x128xf32> to vector<8x128xf32>
    %69 = arith.addf %65, %68 : vector<8x128xf32>
    %cst_37 = arith.constant 0.000000e+00 : f32
    %70 = vector.broadcast %cst_37 : f32 to vector<8x128xf32>
    %71 = arith.maximumf %69, %70 : vector<8x128xf32>
    %c0_38 = arith.constant 0 : index
    %c0_39 = arith.constant 0 : index
    %72 = vector.load %arg8[%c0_38, %c0_39] : memref<1x128xf32, #tpu.memory_space<vmem>>, vector<1x128xf32>
    "tpu.trace_start"() <{level = 10 : i32, message = "oh,bh->ob"}> : () -> ()
    %cst_40 = arith.constant dense<0.000000e+00> : vector<1x8xf32>
    %73 = tpu.matmul %72, %71, %cst_40 {dimension_numbers = #tpu.dot_dimension_numbers<[1], [1], [0], [0], [0, 0, 1, 0], [], []>} : vector<1x128xf32>, vector<8x128xf32>, vector<1x8xf32> -> vector<1x8xf32>
    "tpu.trace_stop"() : () -> ()
    %c0_41 = arith.constant 0 : index
    %c0_42 = arith.constant 0 : index
    %74 = vector.load %arg9[%c0_41, %c0_42] : memref<1x1xf32, #tpu.memory_space<vmem>>, vector<1x1xf32>
    %75 = vector.broadcast %74 : vector<1x1xf32> to vector<1x8xf32>
    %76 = arith.addf %73, %75 : vector<1x8xf32>
    %c0_43 = arith.constant 0 : index
    %c0_44 = arith.constant 0 : index
    %77 = vector.load %arg10[%c0_43, %c0_44] : memref<1x8xf32, #tpu.memory_space<vmem>>, vector<1x8xf32>
    tpu.vector_store %arg10[%c0_43, %c0_44], %76 {strides = array<i32>} : memref<1x8xf32, #tpu.memory_space<vmem>>, vector<1x8xf32>,
    return
  }
  func.func @transform_0(%arg0: i32) -> (i32, i32) {
    %c0_i32 = arith.constant 0 : i32
    %c0_i32_0 = arith.constant 0 : i32
    return %arg0, %c0_i32 : i32, i32
  }
  func.func @transform_1(%arg0: i32) -> (i32, i32) {
    %c0_i32 = arith.constant 0 : i32
    %c0_i32_0 = arith.constant 0 : i32
    return %arg0, %c0_i32 : i32, i32
  }
  func.func @transform_2(%arg0: i32) -> (i32, i32) {
    %c0_i32 = arith.constant 0 : i32
    %c0_i32_0 = arith.constant 0 : i32
    %c0_i32_1 = arith.constant 0 : i32
    return %c0_i32, %c0_i32_0 : i32, i32
  }
  func.func @transform_3(%arg0: i32) -> (i32, i32) {
    %c0_i32 = arith.constant 0 : i32
    %c0_i32_0 = arith.constant 0 : i32
    %c0_i32_1 = arith.constant 0 : i32
    return %c0_i32, %c0_i32_0 : i32, i32
  }
  func.func @transform_4(%arg0: i32) -> (i32, i32) {
    %c0_i32 = arith.constant 0 : i32
    %c0_i32_0 = arith.constant 0 : i32
    %c0_i32_1 = arith.constant 0 : i32
    return %c0_i32, %c0_i32_0 : i32, i32
  }
  func.func @transform_5(%arg0: i32) -> (i32, i32, i32) {
    %c0_i32 = arith.constant 0 : i32
    %c0_i32_0 = arith.constant 0 : i32
    %c0_i32_1 = arith.constant 0 : i32
    %c0_i32_2 = arith.constant 0 : i32
    return %c0_i32, %c0_i32_0, %c0_i32_1 : i32, i32, i32
  }
  func.func @transform_6(%arg0: i32) -> (i32, i32, i32) {
    %c0_i32 = arith.constant 0 : i32
    %c0_i32_0 = arith.constant 0 : i32
    %c0_i32_1 = arith.constant 0 : i32
    %c0_i32_2 = arith.constant 0 : i32
    return %c0_i32, %c0_i32_0, %c0_i32_1 : i32, i32, i32
  }
  func.func @transform_7(%arg0: i32) -> (i32, i32) {
    %c0_i32 = arith.constant 0 : i32
    %c0_i32_0 = arith.constant 0 : i32
    %c0_i32_1 = arith.constant 0 : i32
    return %c0_i32, %c0_i32_0 : i32, i32
  }
  func.func @transform_8(%arg0: i32) -> (i32, i32) {
    %c0_i32 = arith.constant 0 : i32
    %c0_i32_0 = arith.constant 0 : i32
    %c0_i32_1 = arith.constant 0 : i32
    return %c0_i32, %c0_i32_0 : i32, i32
  }
  func.func @transform_9(%arg0: i32) -> (i32, i32) {
    %c0_i32 = arith.constant 0 : i32
    %c0_i32_0 = arith.constant 0 : i32
    return %c0_i32, %arg0 : i32, i32
  }
}

module attributes {stable_mosaic.version = 11 : i64} {
  func.func @_critic_kernel(%arg0: i32, %arg1: memref<8x16xbf16, #tpu.memory_space<vmem>>, %arg2: memref<8x4xbf16, #tpu.memory_space<vmem>>, %arg3: memref<16x128xbf16, #tpu.memory_space<vmem>>, %arg4: memref<4x128xbf16, #tpu.memory_space<vmem>>, %arg5: memref<1x128xf32, #tpu.memory_space<vmem>>, %arg6: memref<2x128x128xbf16, #tpu.memory_space<vmem>>, %arg7: memref<2x1x128xf32, #tpu.memory_space<vmem>>, %arg8: memref<1x128xf32, #tpu.memory_space<vmem>>, %arg9: memref<1x1xf32, #tpu.memory_space<vmem>>, %arg10: memref<1x8xf32, #tpu.memory_space<vmem>>) attributes {dimension_semantics = [#tpu.dimension_semantics<parallel>], iteration_bounds = array<i64: 1>, scalar_prefetch = 0 : i64, scratch_operands = 0 : i64, tpu.core_type = #tpu.core_type<tc>, window_params = [{transform_indices = @transform_0, window_bounds = array<i64: 8, 16>}, {transform_indices = @transform_1, window_bounds = array<i64: 8, 4>}, {pipeline_mode = #tpu.pipeline_mode<synchronous>, transform_indices = @transform_2, window_bounds = array<i64: 16, 128>}, {pipeline_mode = #tpu.pipeline_mode<synchronous>, transform_indices = @transform_3, window_bounds = array<i64: 4, 128>}, {pipeline_mode = #tpu.pipeline_mode<synchronous>, transform_indices = @transform_4, window_bounds = array<i64: 1, 128>}, {pipeline_mode = #tpu.pipeline_mode<synchronous>, transform_indices = @transform_5, window_bounds = array<i64: 2, 128, 128>}, {pipeline_mode = #tpu.pipeline_mode<synchronous>, transform_indices = @transform_6, window_bounds = array<i64: 2, 1, 128>}, {pipeline_mode = #tpu.pipeline_mode<synchronous>, transform_indices = @transform_7, window_bounds = array<i64: 1, 128>}, {pipeline_mode = #tpu.pipeline_mode<synchronous>, transform_indices = @transform_8, window_bounds = array<i64: 1, 1>}, {transform_indices = @transform_9, window_bounds = array<i64: 1, 8>}]} {
    %c0 = arith.constant 0 : index
    %c0_0 = arith.constant 0 : index
    %0 = vector.load %arg1[%c0, %c0_0] : memref<8x16xbf16, #tpu.memory_space<vmem>>, vector<8x16xbf16>
    %c0_1 = arith.constant 0 : index
    %c0_2 = arith.constant 0 : index
    %1 = vector.load %arg3[%c0_1, %c0_2] : memref<16x128xbf16, #tpu.memory_space<vmem>>, vector<16x128xbf16>
    %cst = arith.constant dense<0.000000e+00> : vector<8x128xf32>
    %2 = tpu.matmul %0, %1, %cst {dimension_numbers = #tpu.dot_dimension_numbers<[1], [0], [0], [1], [0, 0, 1, 1], [], []>} : vector<8x16xbf16>, vector<16x128xbf16>, vector<8x128xf32> -> vector<8x128xf32>
    %c0_3 = arith.constant 0 : index
    %c0_4 = arith.constant 0 : index
    %3 = vector.load %arg2[%c0_3, %c0_4] : memref<8x4xbf16, #tpu.memory_space<vmem>>, vector<8x4xbf16>
    %c0_5 = arith.constant 0 : index
    %c0_6 = arith.constant 0 : index
    %4 = vector.load %arg4[%c0_5, %c0_6] : memref<4x128xbf16, #tpu.memory_space<vmem>>, vector<4x128xbf16>
    %cst_7 = arith.constant dense<0.000000e+00> : vector<8x128xf32>
    %5 = tpu.matmul %3, %4, %cst_7 {dimension_numbers = #tpu.dot_dimension_numbers<[1], [0], [0], [1], [0, 0, 1, 1], [], []>} : vector<8x4xbf16>, vector<4x128xbf16>, vector<8x128xf32> -> vector<8x128xf32>
    %6 = arith.addf %2, %5 : vector<8x128xf32>
    %c0_8 = arith.constant 0 : index
    %c0_9 = arith.constant 0 : index
    %7 = vector.load %arg5[%c0_8, %c0_9] : memref<1x128xf32, #tpu.memory_space<vmem>>, vector<1x128xf32>
    %8 = vector.broadcast %7 : vector<1x128xf32> to vector<8x128xf32>
    %9 = arith.addf %6, %8 : vector<8x128xf32>
    %cst_10 = arith.constant 0.000000e+00 : f32
    %10 = vector.broadcast %cst_10 : f32 to vector<8x128xf32>
    %11 = arith.maximumf %9, %10 : vector<8x128xf32>
    %cst_11 = arith.constant dense<0.000000e+00> : vector<8xf32>
    %12 = vector.multi_reduction <add>, %11, %cst_11 [1] : vector<8x128xf32> to vector<8xf32>
    %13 = vector.shape_cast %12 : vector<8xf32> to vector<8x1xf32>
    %14 = arith.mulf %11, %11 : vector<8x128xf32>
    %cst_12 = arith.constant dense<0.000000e+00> : vector<8xf32>
    %15 = vector.multi_reduction <add>, %14, %cst_12 [1] : vector<8x128xf32> to vector<8xf32>
    %16 = vector.shape_cast %15 : vector<8xf32> to vector<8x1xf32>
    %cst_13 = arith.constant 3.125000e-02 : f32
    %17 = vector.broadcast %cst_13 : f32 to vector<8x1xf32>
    %18 = arith.mulf %13, %17 : vector<8x1xf32>
    %cst_14 = arith.constant 3.125000e-02 : f32
    %19 = vector.broadcast %cst_14 : f32 to vector<8x1xf32>
    %20 = arith.mulf %16, %19 : vector<8x1xf32>
    %21 = arith.mulf %18, %18 : vector<8x1xf32>
    %22 = arith.subf %20, %21 : vector<8x1xf32>
    %cst_15 = arith.constant 0.000000e+00 : f32
    %23 = vector.broadcast %cst_15 : f32 to vector<8x1xf32>
    %24 = arith.maximumf %22, %23 : vector<8x1xf32>
    %25 = vector.broadcast %18 : vector<8x1xf32> to vector<8x128xf32>
    %26 = arith.subf %11, %25 : vector<8x128xf32>
    %cst_16 = arith.constant 9.99999974E-6 : f32
    %27 = vector.broadcast %cst_16 : f32 to vector<8x1xf32>
    %28 = arith.addf %24, %27 : vector<8x1xf32>
    %29 = math.rsqrt %28 : vector<8x1xf32>
    %30 = vector.broadcast %29 : vector<8x1xf32> to vector<8x128xf32>
    %31 = arith.mulf %26, %30 : vector<8x128xf32>
    %32 = arith.truncf %31 : vector<8x128xf32> to vector<8x128xbf16>
    %c0_17 = arith.constant 0 : index
    %c0_18 = arith.constant 0 : index
    %c0_19 = arith.constant 0 : index
    %33 = vector.load %arg6[%c0_17, %c0_18, %c0_19] : memref<2x128x128xbf16, #tpu.memory_space<vmem>>, vector<1x128x128xbf16>
    %34 = vector.shape_cast %33 : vector<1x128x128xbf16> to vector<128x128xbf16>
    %cst_20 = arith.constant dense<0.000000e+00> : vector<8x128xf32>
    %35 = tpu.matmul %32, %34, %cst_20 {dimension_numbers = #tpu.dot_dimension_numbers<[1], [0], [0], [1], [0, 0, 1, 1], [], []>} : vector<8x128xbf16>, vector<128x128xbf16>, vector<8x128xf32> -> vector<8x128xf32>
    %c0_21 = arith.constant 0 : index
    %c0_22 = arith.constant 0 : index
    %c0_23 = arith.constant 0 : index
    %36 = vector.load %arg7[%c0_21, %c0_22, %c0_23] : memref<2x1x128xf32, #tpu.memory_space<vmem>>, vector<1x1x128xf32>
    %37 = vector.shape_cast %36 : vector<1x1x128xf32> to vector<1x128xf32>
    %38 = vector.broadcast %37 : vector<1x128xf32> to vector<8x128xf32>
    %39 = arith.addf %35, %38 : vector<8x128xf32>
    %cst_24 = arith.constant 0.000000e+00 : f32
    %40 = vector.broadcast %cst_24 : f32 to vector<8x128xf32>
    %41 = arith.maximumf %39, %40 : vector<8x128xf32>
    %cst_25 = arith.constant dense<0.000000e+00> : vector<8xf32>
    %42 = vector.multi_reduction <add>, %41, %cst_25 [1] : vector<8x128xf32> to vector<8xf32>
    %43 = vector.shape_cast %42 : vector<8xf32> to vector<8x1xf32>
    %44 = arith.mulf %41, %41 : vector<8x128xf32>
    %cst_26 = arith.constant dense<0.000000e+00> : vector<8xf32>
    %45 = vector.multi_reduction <add>, %44, %cst_26 [1] : vector<8x128xf32> to vector<8xf32>
    %46 = vector.shape_cast %45 : vector<8xf32> to vector<8x1xf32>
    %cst_27 = arith.constant 3.125000e-02 : f32
    %47 = vector.broadcast %cst_27 : f32 to vector<8x1xf32>
    %48 = arith.mulf %43, %47 : vector<8x1xf32>
    %cst_28 = arith.constant 3.125000e-02 : f32
    %49 = vector.broadcast %cst_28 : f32 to vector<8x1xf32>
    %50 = arith.mulf %46, %49 : vector<8x1xf32>
    %51 = arith.mulf %48, %48 : vector<8x1xf32>
    %52 = arith.subf %50, %51 : vector<8x1xf32>
    %cst_29 = arith.constant 0.000000e+00 : f32
    %53 = vector.broadcast %cst_29 : f32 to vector<8x1xf32>
    %54 = arith.maximumf %52, %53 : vector<8x1xf32>
    %55 = vector.broadcast %48 : vector<8x1xf32> to vector<8x128xf32>
    %56 = arith.subf %41, %55 : vector<8x128xf32>
    %cst_30 = arith.constant 9.99999974E-6 : f32
    %57 = vector.broadcast %cst_30 : f32 to vector<8x1xf32>
    %58 = arith.addf %54, %57 : vector<8x1xf32>
    %59 = math.rsqrt %58 : vector<8x1xf32>
    %60 = vector.broadcast %59 : vector<8x1xf32> to vector<8x128xf32>
    %61 = arith.mulf %56, %60 : vector<8x128xf32>
    %62 = arith.truncf %61 : vector<8x128xf32> to vector<8x128xbf16>
    %c1 = arith.constant 1 : index
    %c0_31 = arith.constant 0 : index
    %c0_32 = arith.constant 0 : index
    %63 = vector.load %arg6[%c1, %c0_31, %c0_32] : memref<2x128x128xbf16, #tpu.memory_space<vmem>>, vector<1x128x128xbf16>
    %64 = vector.shape_cast %63 : vector<1x128x128xbf16> to vector<128x128xbf16>
    %cst_33 = arith.constant dense<0.000000e+00> : vector<8x128xf32>
    %65 = tpu.matmul %62, %64, %cst_33 {dimension_numbers = #tpu.dot_dimension_numbers<[1], [0], [0], [1], [0, 0, 1, 1], [], []>} : vector<8x128xbf16>, vector<128x128xbf16>, vector<8x128xf32> -> vector<8x128xf32>
    %c1_34 = arith.constant 1 : index
    %c0_35 = arith.constant 0 : index
    %c0_36 = arith.constant 0 : index
    %66 = vector.load %arg7[%c1_34, %c0_35, %c0_36] : memref<2x1x128xf32, #tpu.memory_space<vmem>>, vector<1x1x128xf32>
    %67 = vector.shape_cast %66 : vector<1x1x128xf32> to vector<1x128xf32>
    %68 = vector.broadcast %67 : vector<1x128xf32> to vector<8x128xf32>
    %69 = arith.addf %65, %68 : vector<8x128xf32>
    %cst_37 = arith.constant 0.000000e+00 : f32
    %70 = vector.broadcast %cst_37 : f32 to vector<8x128xf32>
    %71 = arith.maximumf %69, %70 : vector<8x128xf32>
    %c0_38 = arith.constant 0 : index
    %c0_39 = arith.constant 0 : index
    %72 = vector.load %arg8[%c0_38, %c0_39] : memref<1x128xf32, #tpu.memory_space<vmem>>, vector<1x128xf32>
    "tpu.trace_start"() <{level = 10 : i32, message = "oh,bh->ob"}> : () -> ()
    %cst_40 = arith.constant dense<0.000000e+00> : vector<1x8xf32>
    %73 = tpu.matmul %72, %71, %cst_40 {dimension_numbers = #tpu.dot_dimension_numbers<[1], [1], [0], [0], [0, 0, 1, 0], [], []>} : vector<1x128xf32>, vector<8x128xf32>, vector<1x8xf32> -> vector<1x8xf32>
    "tpu.trace_stop"() : () -> ()
    %c0_41 = arith.constant 0 : index
    %c0_42 = arith.constant 0 : index
    %74 = vector.load %arg9[%c0_41, %c0_42] : memref<1x1xf32, #tpu.memory_space<vmem>>, vector<1x1xf32>
    %75 = vector.broadcast %74 : vector<1x1xf32> to vector<1x8xf32>
    %76 = arith.addf %73, %75 : vector<1x8xf32>
    %c0_43 = arith.constant 0 : index
    %c0_44 = arith.constant 0 : index
    %77 = vector.load %arg10[%c0_43, %c0_44] : memref<1x8xf32, #tpu.memory_space<vmem>>, vector<1x8xf32>
    tpu.vector_store %arg10[%c0_43, %c0_44], %76 {strides = array<i32>} : memref<1x8xf32, #tpu.memory_space<vmem>>, vector<1x8xf32>,
    return
  }
  func.func @transform_0(%arg0: i32) -> (i32, i32) {
    %c0_i32 = arith.constant 0 : i32
    %c0_i32_0 = arith.constant 0 : i32
    return %arg0, %c0_i32 : i32, i32
  }
  func.func @transform_1(%arg0: i32) -> (i32, i32) {
    %c0_i32 = arith.constant 0 : i32
    %c0_i32_0 = arith.constant 0 : i32
    return %arg0, %c0_i32 : i32, i32
  }
  func.func @transform_2(%arg0: i32) -> (i32, i32) {
    %c0_i32 = arith.constant 0 : i32
    %c0_i32_0 = arith.constant 0 : i32
    %c0_i32_1 = arith.constant 0 : i32
    return %c0_i32, %c0_i32_0 : i32, i32
  }
  func.func @transform_3(%arg0: i32) -> (i32, i32) {
    %c0_i32 = arith.constant 0 : i32
    %c0_i32_0 = arith.constant 0 : i32
    %c0_i32_1 = arith.constant 0 : i32
    return %c0_i32, %c0_i32_0 : i32, i32
  }
  func.func @transform_4(%arg0: i32) -> (i32, i32) {
    %c0_i32 = arith.constant 0 : i32
    %c0_i32_0 = arith.constant 0 : i32
    %c0_i32_1 = arith.constant 0 : i32
    return %c0_i32, %c0_i32_0 : i32, i32
  }
  func.func @transform_5(%arg0: i32) -> (i32, i32, i32) {
    %c0_i32 = arith.constant 0 : i32
    %c0_i32_0 = arith.constant 0 : i32
    %c0_i32_1 = arith.constant 0 : i32
    %c0_i32_2 = arith.constant 0 : i32
    return %c0_i32, %c0_i32_0, %c0_i32_1 : i32, i32, i32
  }
  func.func @transform_6(%arg0: i32) -> (i32, i32, i32) {
    %c0_i32 = arith.constant 0 : i32
    %c0_i32_0 = arith.constant 0 : i32
    %c0_i32_1 = arith.constant 0 : i32
    %c0_i32_2 = arith.constant 0 : i32
    return %c0_i32, %c0_i32_0, %c0_i32_1 : i32, i32, i32
  }
  func.func @transform_7(%arg0: i32) -> (i32, i32) {
    %c0_i32 = arith.constant 0 : i32
    %c0_i32_0 = arith.constant 0 : i32
    %c0_i32_1 = arith.constant 0 : i32
    return %c0_i32, %c0_i32_0 : i32, i32
  }
  func.func @transform_8(%arg0: i32) -> (i32, i32) {
    %c0_i32 = arith.constant 0 : i32
    %c0_i32_0 = arith.constant 0 : i32
    %c0_i32_1 = arith.constant 0 : i32
    return %c0_i32, %c0_i32_0 : i32, i32
  }
  func.func @transform_9(%arg0: i32) -> (i32, i32) {
    %c0_i32 = arith.constant 0 : i32
    %c0_i32_0 = arith.constant 0 : i32
    return %c0_i32, %arg0 : i32, i32
  }
}

</mosaic_0001>

<llo_original>
// kernel: tpu_custom_call.1
$region0: #{tpu_custom_call.1}
  #allocation0 [shape = 'u32[]', space=smem, size = 0x4, offset = 0x4, fixed_abs, tag = 'smem constant byte address 0x4 - core index']
  #allocation1 [shape = 'u32[144,128]{1,0:T(1,128)}', space=vmem, size = 0x12000, scoped, tag = 'internal scratch']
  #allocation2 [shape = 'f32[1,1]{1,0:T(1,128)S(1)}', space=vmem, size = 0x200, scoped, tag = 'scoped memory for tpu_custom_call.1']
  %s0 = inlined_call_operand.vmem [shape: bf16[8,16], index: 0, kind: input, shape index: {}]
  %s1 = inlined_call_operand.vmem [shape: bf16[8,4], index: 1, kind: input, shape index: {}]
  %s2 = inlined_call_operand.vmem [shape: bf16[16,128], index: 2, kind: input, shape index: {}]
  %s3 = inlined_call_operand.vmem [shape: bf16[4,128], index: 3, kind: input, shape index: {}]
  %s4 = inlined_call_operand.vmem [shape: f32[1,128], index: 4, kind: input, shape index: {}]
  %s5 = inlined_call_operand.hbm [shape: bf16[2,128,128], index: 5, kind: input, shape index: {}]
  %s6 = inlined_call_operand.vmem [shape: f32[2,1,128], index: 6, kind: input, shape index: {}]
  %s7 = inlined_call_operand.vmem [shape: f32[1,128], index: 7, kind: input, shape index: {}]
  %s8 = inlined_call_operand.<no memory space> [shape: f32[1,1], index: 8, kind: input, shape index: {}]
  %s9 = inlined_call_operand.hbm [shape: f32[1,8], index: 9, kind: output, shape index: {}]
  %s10 = sld [smem:[#allocation0]]
  $region50: #{tpu_custom_call.1} parent=0
    _
  %s12 = ssub.s32 1, %s10
  %s13 = scalar_select 0, %s12, %s10
  %v14 = vstv %s8
  %15 = vst [vmem:[#allocation2] sm:$0x1] %v14
  $region1: #{tpu_custom_call.1} parent=0
    #allocation3 [shape = 'u8[65536]{0}', space=vmem, size = 0x10000, scoped, tag = 'input window, operand 5, single buffered']
    #allocation4 [shape = 's32[1]{0}', space=sflag, size = 0x4, scoped, tag = 'scoped memory for tpu_custom_call.1']
    #allocation5 [shape = 's32[1]{0}', space=sflag, size = 0x4, scoped, tag = 'scoped memory for tpu_custom_call.1']
    #allocation6 [shape = 'u8[512]{0}', space=vmem, size = 0x400, scoped, tag = 'output window, operand 0, single buffered']
    %16 = vsyncpa [#allocation4], 0
    %17 = vsyncpa [#allocation5], 0
    // Predicated region
    $region2: #{tpu_custom_call.1} parent=1 // pred_check
      _
    $region3: #{tpu_custom_call.1} parent=1 // pred_check_branch
      %19 = sbr.rel (0) target = $region5
    $region4: #{tpu_custom_call.1} parent=1 // pred_region
      _
    $region5: #{tpu_custom_call.1} parent=1 // pred_fallthru
      _
    // Predicated region
    $region6: #{tpu_custom_call.1} parent=1 // pred_check
      _
    $region7: #{tpu_custom_call.1} parent=1 // pred_check_branch
      %21 = sbr.rel (0) target = $region9
    $region8: #{tpu_custom_call.1} parent=1 // pred_region
      _
    $region9: #{tpu_custom_call.1} parent=1 // pred_fallthru
      _
    // Predicated region
    $region10: #{tpu_custom_call.1} parent=1 // pred_check
      _
    $region11: #{tpu_custom_call.1} parent=1 // pred_check_branch
      %23 = sbr.rel (0) target = $region13
    $region12: #{tpu_custom_call.1} parent=1 // pred_region
      _
    $region13: #{tpu_custom_call.1} parent=1 // pred_fallthru
      _
    // Predicated region
    $region14: #{tpu_custom_call.1} parent=1 // pred_check
      _
    $region15: #{tpu_custom_call.1} parent=1 // pred_check_branch
      %25 = sbr.rel (0) target = $region17
    $region16: #{tpu_custom_call.1} parent=1 // pred_region
      _
    $region17: #{tpu_custom_call.1} parent=1 // pred_fallthru
      _
    // Predicated region
    $region18: #{tpu_custom_call.1} parent=1 // pred_check
      _
    $region19: #{tpu_custom_call.1} parent=1 // pred_check_branch
      %27 = sbr.rel (0) target = $region21
    $region20: #{tpu_custom_call.1} parent=1 // pred_region
      _
    $region21: #{tpu_custom_call.1} parent=1 // pred_fallthru
      _
    // Predicated region
    $region22: #{tpu_custom_call.1} parent=1 // pred_check
      _
    $region23: #{tpu_custom_call.1} parent=1 // pred_check_branch
      %29 = sbr.rel (0) target = $region25
    $region24: #{tpu_custom_call.1} parent=1 // pred_region
      %s31 = ssub.s32 2048, 2048
      %32 = vsyncadd [#allocation4], %s31
      %s33 = sshll.u32 [#allocation3], 4
      %s34 = int_to_ptr.vmem [resolvable:$true] %s33
      %39 = dma.hbm_to_vmem [thread:$0]  %s5, 2048, %s34, [#allocation4], 64, 64, 4
    $region25: #{tpu_custom_call.1} parent=1 // pred_fallthru
      _
    // Predicated region
    $region26: #{tpu_custom_call.1} parent=1 // pred_check
      _
    $region27: #{tpu_custom_call.1} parent=1 // pred_check_branch
      %41 = sbr.rel (0) target = $region29
    $region28: #{tpu_custom_call.1} parent=1 // pred_region
      _
    $region29: #{tpu_custom_call.1} parent=1 // pred_fallthru
      _
    // Predicated region
    $region30: #{tpu_custom_call.1} parent=1 // pred_check
      _
    $region31: #{tpu_custom_call.1} parent=1 // pred_check_branch
      %43 = sbr.rel (0) target = $region33
    $region32: #{tpu_custom_call.1} parent=1 // pred_region
      _
    $region33: #{tpu_custom_call.1} parent=1 // pred_fallthru
      _
    // Predicated region
    $region34: #{tpu_custom_call.1} parent=1 // pred_check
      _
    $region35: #{tpu_custom_call.1} parent=1 // pred_check_branch
      %45 = sbr.rel (0) target = $region37
    $region36: #{tpu_custom_call.1} parent=1 // pred_region
      _
    $region37: #{tpu_custom_call.1} parent=1 // pred_fallthru
      _
    // Predicated region
    $region38: #{tpu_custom_call.1} parent=1 // pred_check
      _
    $region39: #{tpu_custom_call.1} parent=1 // pred_check_branch
      %47 = sbr.rel (0) target = $region41
    $region40: #{tpu_custom_call.1} parent=1 // pred_region
      %48 = dma.done [#allocation4], 2048
    $region41: #{tpu_custom_call.1} parent=1 // pred_fallthru
      _
    %v50 = vld [vmem:[%s0] sm:$0xf]
    %v51 = vld [vmem:[%s2] sm:$0xf]
    %v52 = vld [vmem:[%s2 + $0x4] sm:$0xf]
    %v53 = vld [vmem:[%s1] sm:$0xf]
    %v54 = vld [vmem:[%s3] sm:$0x3]
    %vm55 = vcmask 31744
    %v57 = vsel %vm55, %v53, 0
    %vm59 = vcmask 1041408
    %v61 = vsel %vm59, %v54, 0
    %63 = vmatprep.subr.bf16.mxu0 0
    %64 = vmatpush1.bf16.msra.mxu0 %v61
    %65 = vmatprep.subr.bf16.mxu0 0
    %66 = vmatpush1.bf16.msra.mxu0 0
    %67 = vmatprep.subr.bf16.mxu0 0
    %68 = vmatpush1.bf16.msra.mxu0 0
    %69 = vmatprep.subr.bf16.mxu0 0
    %70 = vmatpush1.bf16.msra.mxu0 0
    %71 = vmatprep.subr.bf16.mxu0 0
    %72 = vmatpush1.bf16.msra.mxu0 0
    %73 = vmatprep.subr.bf16.mxu0 0
    %74 = vmatpush1.bf16.msra.mxu0 0
    %75 = vmatprep.subr.bf16.mxu0 0
    %76 = vmatpush1.bf16.msra.mxu0 0
    %77 = vmatprep.subr.bf16.mxu0 0
    %78 = vmatpush1.bf16.msra.mxu0 0
    %79 = vmatprep.subr.bf16.mxu0 0
    %80 = vmatpush1.bf16.msra.mxu0 0
    %81 = vmatprep.subr.bf16.mxu0 0
    %82 = vmatpush1.bf16.msra.mxu0 0
    %83 = vmatprep.subr.bf16.mxu0 0
    %84 = vmatpush1.bf16.msra.mxu0 0
    %85 = vmatprep.subr.bf16.mxu0 0
    %86 = vmatpush1.bf16.msra.mxu0 0
    %87 = vmatprep.subr.bf16.mxu0 0
    %88 = vmatpush1.bf16.msra.mxu0 0
    %89 = vmatprep.subr.bf16.mxu0 0
    %90 = vmatpush1.bf16.msra.mxu0 0
    %91 = vmatprep.subr.bf16.mxu0 0
    %92 = vmatpush1.bf16.msra.mxu0 0
    %93 = vmatprep.subr.bf16.mxu0 0
    %94 = vmatpush1.bf16.msra.mxu0 0
    %95 = vmatprep.mubr.bf16.mxu0 0
    %96 = vmatmul.mubr.bf16.gmra.mrb[0].mxu0 %v57
    %v97 = vpop.f32.mrb[0].mxu0
    %v98 = vadd.f32 0.0, %v97
    %v99 = vpop.f32.mrb[0].mxu0
    %v100 = vpop.f32.mrb[0].mxu0
    %v101 = vpop.f32.mrb[0].mxu0
    %102 = vdwg.mxu0
    %v105 = vunpack.c.l.b16 %v51
    %v106 = vunpack.c.l.b16 %v52
    %v107 = vpack.c.b16 %v106, %v105
    %vm109 = vcmask 130048
    %v111 = vsel %vm109, %v50, 0
    %113 = vmatprep.subr.bf16.mxu0 0
    %114 = vmatpush1.bf16.msra.mxu0 %v107
    %115 = vmatprep.subr.bf16.mxu0 0
    %116 = vmatpush1.bf16.msra.mxu0 0
    %117 = vmatprep.subr.bf16.mxu0 0
    %118 = vmatpush1.bf16.msra.mxu0 0
    %119 = vmatprep.subr.bf16.mxu0 0
    %120 = vmatpush1.bf16.msra.mxu0 0
    %121 = vmatprep.subr.bf16.mxu0 0
    %122 = vmatpush1.bf16.msra.mxu0 0
    %123 = vmatprep.subr.bf16.mxu0 0
    %124 = vmatpush1.bf16.msra.mxu0 0
    %125 = vmatprep.subr.bf16.mxu0 0
    %126 = vmatpush1.bf16.msra.mxu0 0
    %127 = vmatprep.subr.bf16.mxu0 0
    %128 = vmatpush1.bf16.msra.mxu0 0
    %129 = vmatprep.subr.bf16.mxu0 0
    %130 = vmatpush1.bf16.msra.mxu0 0
    %131 = vmatprep.subr.bf16.mxu0 0
    %132 = vmatpush1.bf16.msra.mxu0 0
    %133 = vmatprep.subr.bf16.mxu0 0
    %134 = vmatpush1.bf16.msra.mxu0 0
    %135 = vmatprep.subr.bf16.mxu0 0
    %136 = vmatpush1.bf16.msra.mxu0 0
    %137 = vmatprep.subr.bf16.mxu0 0
    %138 = vmatpush1.bf16.msra.mxu0 0
    %139 = vmatprep.subr.bf16.mxu0 0
    %140 = vmatpush1.bf16.msra.mxu0 0
    %141 = vmatprep.subr.bf16.mxu0 0
    %142 = vmatpush1.bf16.msra.mxu0 0
    %143 = vmatprep.subr.bf16.mxu0 0
    %144 = vmatpush1.bf16.msra.mxu0 0
    %145 = vmatprep.mubr.bf16.mxu0 0
    %146 = vmatmul.mubr.bf16.gmra.mrb[0].mxu0 %v111
    %v147 = vpop.f32.mrb[0].mxu0
    %v148 = vadd.f32 %v98, %v147
    %v149 = vpop.f32.mrb[0].mxu0
    %v150 = vpop.f32.mrb[0].mxu0
    %v151 = vpop.f32.mrb[0].mxu0
    %152 = vdwg.mxu0
    %v153 = vld [vmem:[%s4] sm:$0x1]
    %v155 = vlaneseq
    %v156 = vshrl.u32 %v155, 7
    %v157 = vsub.s32 0, %v156
    %v158 = vrot.slane %v153, %v157
    %v160 = vadd.f32 %v148, %v158
    %v161 = vmax.f32 %v160, 0.0
    %162 = vadd.xlane.f32.xlu0 %v161
    %v163 = vpop.xlane.xlu0 %162
    %v164 = vmul.f32 %v161, %v161
    %165 = vadd.xlane.f32.xlu0 %v164
    %v166 = vpop.xlane.xlu0 %165
    %v167 = vmul.f32 %v163, 0.03125
    %v168 = vmul.f32 %v166, 0.03125
    %v169 = vmul.f32 %v167, %v167
    %v170 = vsub.f32 %v168, %v169
    %v171 = vmax.f32 %v170, 0.0
    %v172 = vsub.f32 %v161, %v167
    %v173 = vadd.f32 %v171, 1e-05
    %v174 = vrsqrt.pop %v173
    %v175 = vmul.f32 %v172, %v174
    %v176 = vpack.c.bf16 %v175, %v175
    %v177 = vld [vmem:[#allocation3] sm:$0xf]
    %v178 = vld [vmem:[#allocation3 + $0x4] sm:$0xf]
    %v179 = vld [vmem:[#allocation3 + $0x8] sm:$0xf]
    %v180 = vld [vmem:[#allocation3 + $0xc] sm:$0xf]
    %v181 = vld [vmem:[#allocation3 + $0x10] sm:$0xf]
    %v182 = vld [vmem:[#allocation3 + $0x14] sm:$0xf]
    %v183 = vld [vmem:[#allocation3 + $0x18] sm:$0xf]
    %v184 = vld [vmem:[#allocation3 + $0x1c] sm:$0xf]
    %v185 = vld [vmem:[#allocation3 + $0x20] sm:$0xf]
    %v186 = vld [vmem:[#allocation3 + $0x24] sm:$0xf]
    %v187 = vld [vmem:[#allocation3 + $0x28] sm:$0xf]
    %v188 = vld [vmem:[#allocation3 + $0x2c] sm:$0xf]
    %v189 = vld [vmem:[#allocation3 + $0x30] sm:$0xf]
    %v190 = vld [vmem:[#allocation3 + $0x34] sm:$0xf]
    %v191 = vld [vmem:[#allocation3 + $0x38] sm:$0xf]
    %v192 = vld [vmem:[#allocation3 + $0x3c] sm:$0xf]
    %v193 = vld [vmem:[%s6] sm:$0x1]
    %v195 = vlaneseq
    %v196 = vshrl.u32 %v195, 7
    %v197 = vsub.s32 0, %v196
    %v198 = vrot.slane %v193, %v197
    %v216 = vunpack.c.l.b16 %v177
    %v217 = vunpack.c.l.b16 %v178
    %v218 = vunpack.c.l.b16 %v179
    %v219 = vunpack.c.l.b16 %v180
    %v220 = vunpack.c.l.b16 %v181
    %v221 = vunpack.c.l.b16 %v182
    %v222 = vunpack.c.l.b16 %v183
    %v223 = vunpack.c.l.b16 %v184
    %v224 = vunpack.c.l.b16 %v185
    %v225 = vunpack.c.l.b16 %v186
    %v226 = vunpack.c.l.b16 %v187
    %v227 = vunpack.c.l.b16 %v188
    %v228 = vunpack.c.l.b16 %v189
    %v229 = vunpack.c.l.b16 %v190
    %v230 = vunpack.c.l.b16 %v191
    %v231 = vunpack.c.l.b16 %v192
    %v232 = vpack.c.b16 %v217, %v216
    %v233 = vpack.c.b16 %v219, %v218
    %v234 = vpack.c.b16 %v221, %v220
    %v235 = vpack.c.b16 %v223, %v222
    %v236 = vpack.c.b16 %v225, %v224
    %v237 = vpack.c.b16 %v227, %v226
    %v238 = vpack.c.b16 %v229, %v228
    %v239 = vpack.c.b16 %v231, %v230
    %248 = vmatprep.subr.bf16.mxu0 0
    %249 = vmatpush1.bf16.msra.mxu0 %v232
    %250 = vmatprep.subr.bf16.mxu0 0
    %251 = vmatpush1.bf16.msra.mxu0 %v233
    %252 = vmatprep.subr.bf16.mxu0 0
    %253 = vmatpush1.bf16.msra.mxu0 %v234
    %254 = vmatprep.subr.bf16.mxu0 0
    %255 = vmatpush1.bf16.msra.mxu0 %v235
    %256 = vmatprep.subr.bf16.mxu0 0
    %257 = vmatpush1.bf16.msra.mxu0 %v236
    %258 = vmatprep.subr.bf16.mxu0 0
    %259 = vmatpush1.bf16.msra.mxu0 %v237
    %260 = vmatprep.subr.bf16.mxu0 0
    %261 = vmatpush1.bf16.msra.mxu0 %v238
    %262 = vmatprep.subr.bf16.mxu0 0
    %263 = vmatpush1.bf16.msra.mxu0 %v239
    %264 = vmatprep.subr.bf16.mxu0 0
    %265 = vmatpush1.bf16.msra.mxu0 0
    %266 = vmatprep.subr.bf16.mxu0 0
    %267 = vmatpush1.bf16.msra.mxu0 0
    %268 = vmatprep.subr.bf16.mxu0 0
    %269 = vmatpush1.bf16.msra.mxu0 0
    %270 = vmatprep.subr.bf16.mxu0 0
    %271 = vmatpush1.bf16.msra.mxu0 0
    %272 = vmatprep.subr.bf16.mxu0 0
    %273 = vmatpush1.bf16.msra.mxu0 0
    %274 = vmatprep.subr.bf16.mxu0 0
    %275 = vmatpush1.bf16.msra.mxu0 0
    %276 = vmatprep.subr.bf16.mxu0 0
    %277 = vmatpush1.bf16.msra.mxu0 0
    %278 = vmatprep.subr.bf16.mxu0 0
    %279 = vmatpush1.bf16.msra.mxu0 0
    %280 = vmatprep.mubr.bf16.mxu0 0
    %281 = vmatmul.mubr.bf16.gmra.mrb[0].mxu0 %v176
    %v282 = vpop.f32.mrb[0].mxu0
    %v283 = vadd.f32 %v198, %v282
    %v284 = vpop.f32.mrb[0].mxu0
    %v285 = vpop.f32.mrb[0].mxu0
    %v286 = vpop.f32.mrb[0].mxu0
    %287 = vdwg.mxu0
    %v288 = vmax.f32 %v283, 0.0
    %289 = vadd.xlane.f32.xlu0 %v288
    %v290 = vpop.xlane.xlu0 %289
    %v291 = vmul.f32 %v288, %v288
    %292 = vadd.xlane.f32.xlu0 %v291
    %v293 = vpop.xlane.xlu0 %292
    %v294 = vmul.f32 %v290, 0.03125
    %v295 = vmul.f32 %v293, 0.03125
    %v296 = vmul.f32 %v294, %v294
    %v297 = vsub.f32 %v295, %v296
    %v298 = vmax.f32 %v297, 0.0
    %v299 = vsub.f32 %v288, %v294
    %v300 = vadd.f32 %v298, 1e-05
    %v301 = vrsqrt.pop %v300
    %v302 = vmul.f32 %v299, %v301
    %v303 = vpack.c.bf16 %v302, %v302
    %s304 = scalar_lea.vmem [#allocation3], 64
    %v305 = vld [vmem:[%s304] sm:$0xf]
    %v306 = vld [vmem:[%s304 + $0x4] sm:$0xf]
    %v307 = vld [vmem:[%s304 + $0x8] sm:$0xf]
    %v308 = vld [vmem:[%s304 + $0xc] sm:$0xf]
    %v309 = vld [vmem:[%s304 + $0x10] sm:$0xf]
    %v310 = vld [vmem:[%s304 + $0x14] sm:$0xf]
    %v311 = vld [vmem:[%s304 + $0x18] sm:$0xf]
    %v312 = vld [vmem:[%s304 + $0x1c] sm:$0xf]
    %v313 = vld [vmem:[%s304 + $0x20] sm:$0xf]
    %v314 = vld [vmem:[%s304 + $0x24] sm:$0xf]
    %v315 = vld [vmem:[%s304 + $0x28] sm:$0xf]
    %v316 = vld [vmem:[%s304 + $0x2c] sm:$0xf]
    %v317 = vld [vmem:[%s304 + $0x30] sm:$0xf]
    %v318 = vld [vmem:[%s304 + $0x34] sm:$0xf]
    %v319 = vld [vmem:[%s304 + $0x38] sm:$0xf]
    %v320 = vld [vmem:[%s304 + $0x3c] sm:$0xf]
    %s321 = scalar_lea.vmem %s6, 1
    %v322 = vld [vmem:[%s321] sm:$0x1]
    %v324 = vlaneseq
    %v325 = vshrl.u32 %v324, 7
    %v326 = vsub.s32 0, %v325
    %v327 = vrot.slane %v322, %v326
    %v345 = vunpack.c.l.b16 %v305
    %v346 = vunpack.c.l.b16 %v306
    %v347 = vunpack.c.l.b16 %v307
    %v348 = vunpack.c.l.b16 %v308
    %v349 = vunpack.c.l.b16 %v309
    %v350 = vunpack.c.l.b16 %v310
    %v351 = vunpack.c.l.b16 %v311
    %v352 = vunpack.c.l.b16 %v312
    %v353 = vunpack.c.l.b16 %v313
    %v354 = vunpack.c.l.b16 %v314
    %v355 = vunpack.c.l.b16 %v315
    %v356 = vunpack.c.l.b16 %v316
    %v357 = vunpack.c.l.b16 %v317
    %v358 = vunpack.c.l.b16 %v318
    %v359 = vunpack.c.l.b16 %v319
    %v360 = vunpack.c.l.b16 %v320
    %v361 = vpack.c.b16 %v346, %v345
    %v362 = vpack.c.b16 %v348, %v347
    %v363 = vpack.c.b16 %v350, %v349
    %v364 = vpack.c.b16 %v352, %v351
    %v365 = vpack.c.b16 %v354, %v353
    %v366 = vpack.c.b16 %v356, %v355
    %v367 = vpack.c.b16 %v358, %v357
    %v368 = vpack.c.b16 %v360, %v359
    %377 = vmatprep.subr.bf16.mxu0 0
    %378 = vmatpush1.bf16.msra.mxu0 %v361
    %379 = vmatprep.subr.bf16.mxu0 0
    %380 = vmatpush1.bf16.msra.mxu0 %v362
    %381 = vmatprep.subr.bf16.mxu0 0
    %382 = vmatpush1.bf16.msra.mxu0 %v363
    %383 = vmatprep.subr.bf16.mxu0 0
    %384 = vmatpush1.bf16.msra.mxu0 %v364
    %385 = vmatprep.subr.bf16.mxu0 0
    %386 = vmatpush1.bf16.msra.mxu0 %v365
    %387 = vmatprep.subr.bf16.mxu0 0
    %388 = vmatpush1.bf16.msra.mxu0 %v366
    %389 = vmatprep.subr.bf16.mxu0 0
    %390 = vmatpush1.bf16.msra.mxu0 %v367
    %391 = vmatprep.subr.bf16.mxu0 0
    %392 = vmatpush1.bf16.msra.mxu0 %v368
    %393 = vmatprep.subr.bf16.mxu0 0
    %394 = vmatpush1.bf16.msra.mxu0 0
    %395 = vmatprep.subr.bf16.mxu0 0
    %396 = vmatpush1.bf16.msra.mxu0 0
    %397 = vmatprep.subr.bf16.mxu0 0
    %398 = vmatpush1.bf16.msra.mxu0 0
    %399 = vmatprep.subr.bf16.mxu0 0
    %400 = vmatpush1.bf16.msra.mxu0 0
    %401 = vmatprep.subr.bf16.mxu0 0
    %402 = vmatpush1.bf16.msra.mxu0 0
    %403 = vmatprep.subr.bf16.mxu0 0
    %404 = vmatpush1.bf16.msra.mxu0 0
    %405 = vmatprep.subr.bf16.mxu0 0
    %406 = vmatpush1.bf16.msra.mxu0 0
    %407 = vmatprep.subr.bf16.mxu0 0
    %408 = vmatpush1.bf16.msra.mxu0 0
    %409 = vmatprep.mubr.bf16.mxu0 0
    %410 = vmatmul.mubr.bf16.gmra.mrb[0].mxu0 %v303
    %v411 = vpop.f32.mrb[0].mxu0
    %v412 = vadd.f32 %v327, %v411
    %v413 = vpop.f32.mrb[0].mxu0
    %v414 = vpop.f32.mrb[0].mxu0
    %v415 = vpop.f32.mrb[0].mxu0
    %416 = vdwg.mxu0
    %v417 = vmax.f32 %v412, 0.0
    %v418 = vld [vmem:[%s7] sm:$0x1]
    %v419 = vld [vmem:[#allocation2] sm:$0x1]
    %421 = vset.pattern.permute.xlu0 0
    %422 = vperm.xlu0 %421, %v419
    %v423 = vpop.permute.xlu0 %422
    %v425 = vlaneseq
    %v426 = vshrl.u32 %v425, 7
    %v427 = vsub.s32 0, %v426
    %v428 = vrot.slane %v423, %v427
    %429 = vmatprep.subr.mxu0 0.0
    %430 = vmatpush1.xpose.msra.mxu0 %v417
    %431 = vmatprep.subr.mxu0 0.0
    %432 = vmatpush1.xpose.msra.mxu0 0.0
    %433 = vmatprep.subr.mxu0 0.0
    %434 = vmatpush1.xpose.msra.mxu0 0.0
    %435 = vmatprep.subr.mxu0 0.0
    %436 = vmatpush1.xpose.msra.mxu0 0.0
    %437 = vmatprep.subr.mxu0 0.0
    %438 = vmatpush1.xpose.msra.mxu0 0.0
    %439 = vmatprep.subr.mxu0 0.0
    %440 = vmatpush1.xpose.msra.mxu0 0.0
    %441 = vmatprep.subr.mxu0 0.0
    %442 = vmatpush1.xpose.msra.mxu0 0.0
    %443 = vmatprep.subr.mxu0 0.0
    %444 = vmatpush1.xpose.msra.mxu0 0.0
    %445 = vmatprep.subr.mxu0 0.0
    %446 = vmatpush1.xpose.msra.mxu0 0.0
    %447 = vmatprep.subr.mxu0 0.0
    %448 = vmatpush1.xpose.msra.mxu0 0.0
    %449 = vmatprep.subr.mxu0 0.0
    %450 = vmatpush1.xpose.msra.mxu0 0.0
    %451 = vmatprep.subr.mxu0 0.0
    %452 = vmatpush1.xpose.msra.mxu0 0.0
    %453 = vmatprep.subr.mxu0 0.0
    %454 = vmatpush1.xpose.msra.mxu0 0.0
    %455 = vmatprep.subr.mxu0 0.0
    %456 = vmatpush1.xpose.msra.mxu0 0.0
    %457 = vmatprep.subr.mxu0 0.0
    %458 = vmatpush1.xpose.msra.mxu0 0.0
    %459 = vmatprep.subr.mxu0 0.0
    %460 = vmatpush1.xpose.msra.mxu0 0.0
    %461 = vmatprep.subr.mxu0 0.0
    %462 = vmatpush1.xpose.msra.mxu0 0.0
    %463 = vmatprep.subr.mxu0 0.0
    %464 = vmatpush1.xpose.msra.mxu0 0.0
    %465 = vmatprep.subr.mxu0 0.0
    %466 = vmatpush1.xpose.msra.mxu0 0.0
    %467 = vmatprep.subr.mxu0 0.0
    %468 = vmatpush1.xpose.msra.mxu0 0.0
    %469 = vmatprep.subr.mxu0 0.0
    %470 = vmatpush1.xpose.msra.mxu0 0.0
    %471 = vmatprep.subr.mxu0 0.0
    %472 = vmatpush1.xpose.msra.mxu0 0.0
    %473 = vmatprep.subr.mxu0 0.0
    %474 = vmatpush1.xpose.msra.mxu0 0.0
    %475 = vmatprep.subr.mxu0 0.0
    %476 = vmatpush1.xpose.msra.mxu0 0.0
    %477 = vmatprep.subr.mxu0 0.0
    %478 = vmatpush1.xpose.msra.mxu0 0.0
    %479 = vmatprep.subr.mxu0 0.0
    %480 = vmatpush1.xpose.msra.mxu0 0.0
    %481 = vmatprep.subr.mxu0 0.0
    %482 = vmatpush1.xpose.msra.mxu0 0.0
    %483 = vmatprep.subr.mxu0 0.0
    %484 = vmatpush1.xpose.msra.mxu0 0.0
    %485 = vmatprep.subr.mxu0 0.0
    %486 = vmatpush1.xpose.msra.mxu0 0.0
    %487 = vmatprep.subr.mxu0 0.0
    %488 = vmatpush1.xpose.msra.mxu0 0.0
    %489 = vmatprep.subr.mxu0 0.0
    %490 = vmatpush1.xpose.msra.mxu0 0.0
    %491 = vmatprep.subr.mxu0 0.0
    %492 = vmatpush1.xpose.msra.mxu0 0.0
    %493 = vmatprep.mubr.f32.mxu0 0.0
    %494 = vmatmul.mubr.f32.gmra.mrb[0].mxu0 %v418
    %v495 = vpop.f32.mrb[0].mxu0
    %v496 = vadd.f32 %v428, %v495
    %v497 = vpop.f32.mrb[0].mxu0
    %498 = vdwg.mxu0
    %vm499 = vcmask 57344
    %500 = vst.msk [vmem:[#allocation6] sm:$0x1] %vm499, %v496
    // Predicated region
    $region42: #{tpu_custom_call.1} parent=1 // pred_check
      _
    $region43: #{tpu_custom_call.1} parent=1 // pred_check_branch
      %502 = sbr.rel (0) target = $region45
    $region44: #{tpu_custom_call.1} parent=1 // pred_region
      %s504 = ssub.s32 16, 16
      %505 = vsyncadd [#allocation5], %s504
      %s507 = sshll.u32 [#allocation6], 4
      %s508 = int_to_ptr.vmem [resolvable:$true] %s507
      %510 = dma.vmem_to_hbm [thread:$0]  %s508, 16, %s9, [#allocation5]
    $region45: #{tpu_custom_call.1} parent=1 // pred_fallthru
      _
    // Predicated region
    $region46: #{tpu_custom_call.1} parent=1 // pred_check
      _
    $region47: #{tpu_custom_call.1} parent=1 // pred_check_branch
      %512 = sbr.rel (0) target = $region49
    $region48: #{tpu_custom_call.1} parent=1 // pred_region
      %513 = dma.done [#allocation5], 16
    $region49: #{tpu_custom_call.1} parent=1 // pred_fallthru
      _
    %514 = vsyncpa [#allocation4], 1
    %515 = vsyncpa [#allocation5], 1

// kernel: tpu_custom_call.1
$region0: #{tpu_custom_call.1}
  #allocation0 [shape = 'u32[]', space=smem, size = 0x4, offset = 0x4, fixed_abs, tag = 'smem constant byte address 0x4 - core index']
  #allocation1 [shape = 'u32[144,128]{1,0:T(1,128)}', space=vmem, size = 0x12000, scoped, tag = 'internal scratch']
  #allocation2 [shape = 'f32[1,1]{1,0:T(1,128)S(1)}', space=vmem, size = 0x200, scoped, tag = 'scoped memory for tpu_custom_call.1']
  %s0 = inlined_call_operand.vmem [shape: bf16[8,16], index: 0, kind: input, shape index: {}]
  %s1 = inlined_call_operand.vmem [shape: bf16[8,4], index: 1, kind: input, shape index: {}]
  %s2 = inlined_call_operand.vmem [shape: bf16[16,128], index: 2, kind: input, shape index: {}]
  %s3 = inlined_call_operand.vmem [shape: bf16[4,128], index: 3, kind: input, shape index: {}]
  %s4 = inlined_call_operand.vmem [shape: f32[1,128], index: 4, kind: input, shape index: {}]
  %s5 = inlined_call_operand.hbm [shape: bf16[2,128,128], index: 5, kind: input, shape index: {}]
  %s6 = inlined_call_operand.vmem [shape: f32[2,1,128], index: 6, kind: input, shape index: {}]
  %s7 = inlined_call_operand.vmem [shape: f32[1,128], index: 7, kind: input, shape index: {}]
  %s8 = inlined_call_operand.<no memory space> [shape: f32[1,1], index: 8, kind: input, shape index: {}]
  %s9 = inlined_call_operand.hbm [shape: f32[1,8], index: 9, kind: output, shape index: {}]
  %s10 = sld [smem:[#allocation0]]
  $region50: #{tpu_custom_call.1} parent=0
    _
  %s12 = ssub.s32 1, %s10
  %s13 = scalar_select 0, %s12, %s10
  %v14 = vstv %s8
  %15 = vst [vmem:[#allocation2] sm:$0x1] %v14
  $region1: #{tpu_custom_call.1} parent=0
    #allocation3 [shape = 'u8[65536]{0}', space=vmem, size = 0x10000, scoped, tag = 'input window, operand 5, single buffered']
    #allocation4 [shape = 's32[1]{0}', space=sflag, size = 0x4, scoped, tag = 'scoped memory for tpu_custom_call.1']
    #allocation5 [shape = 's32[1]{0}', space=sflag, size = 0x4, scoped, tag = 'scoped memory for tpu_custom_call.1']
    #allocation6 [shape = 'u8[512]{0}', space=vmem, size = 0x400, scoped, tag = 'output window, operand 0, single buffered']
    %16 = vsyncpa [#allocation4], 0
    %17 = vsyncpa [#allocation5], 0
    // Predicated region
    $region2: #{tpu_custom_call.1} parent=1 // pred_check
      _
    $region3: #{tpu_custom_call.1} parent=1 // pred_check_branch
      %19 = sbr.rel (0) target = $region5
    $region4: #{tpu_custom_call.1} parent=1 // pred_region
      _
    $region5: #{tpu_custom_call.1} parent=1 // pred_fallthru
      _
    // Predicated region
    $region6: #{tpu_custom_call.1} parent=1 // pred_check
      _
    $region7: #{tpu_custom_call.1} parent=1 // pred_check_branch
      %21 = sbr.rel (0) target = $region9
    $region8: #{tpu_custom_call.1} parent=1 // pred_region
      _
    $region9: #{tpu_custom_call.1} parent=1 // pred_fallthru
      _
    // Predicated region
    $region10: #{tpu_custom_call.1} parent=1 // pred_check
      _
    $region11: #{tpu_custom_call.1} parent=1 // pred_check_branch
      %23 = sbr.rel (0) target = $region13
    $region12: #{tpu_custom_call.1} parent=1 // pred_region
      _
    $region13: #{tpu_custom_call.1} parent=1 // pred_fallthru
      _
    // Predicated region
    $region14: #{tpu_custom_call.1} parent=1 // pred_check
      _
    $region15: #{tpu_custom_call.1} parent=1 // pred_check_branch
      %25 = sbr.rel (0) target = $region17
    $region16: #{tpu_custom_call.1} parent=1 // pred_region
      _
    $region17: #{tpu_custom_call.1} parent=1 // pred_fallthru
      _
    // Predicated region
    $region18: #{tpu_custom_call.1} parent=1 // pred_check
      _
    $region19: #{tpu_custom_call.1} parent=1 // pred_check_branch
      %27 = sbr.rel (0) target = $region21
    $region20: #{tpu_custom_call.1} parent=1 // pred_region
      _
    $region21: #{tpu_custom_call.1} parent=1 // pred_fallthru
      _
    // Predicated region
    $region22: #{tpu_custom_call.1} parent=1 // pred_check
      _
    $region23: #{tpu_custom_call.1} parent=1 // pred_check_branch
      %29 = sbr.rel (0) target = $region25
    $region24: #{tpu_custom_call.1} parent=1 // pred_region
      %s31 = ssub.s32 2048, 2048
      %32 = vsyncadd [#allocation4], %s31
      %s33 = sshll.u32 [#allocation3], 4
      %s34 = int_to_ptr.vmem [resolvable:$true] %s33
      %39 = dma.hbm_to_vmem [thread:$0]  %s5, 2048, %s34, [#allocation4], 64, 64, 4
    $region25: #{tpu_custom_call.1} parent=1 // pred_fallthru
      _
    // Predicated region
    $region26: #{tpu_custom_call.1} parent=1 // pred_check
      _
    $region27: #{tpu_custom_call.1} parent=1 // pred_check_branch
      %41 = sbr.rel (0) target = $region29
    $region28: #{tpu_custom_call.1} parent=1 // pred_region
      _
    $region29: #{tpu_custom_call.1} parent=1 // pred_fallthru
      _
    // Predicated region
    $region30: #{tpu_custom_call.1} parent=1 // pred_check
      _
    $region31: #{tpu_custom_call.1} parent=1 // pred_check_branch
      %43 = sbr.rel (0) target = $region33
    $region32: #{tpu_custom_call.1} parent=1 // pred_region
      _
    $region33: #{tpu_custom_call.1} parent=1 // pred_fallthru
      _
    // Predicated region
    $region34: #{tpu_custom_call.1} parent=1 // pred_check
      _
    $region35: #{tpu_custom_call.1} parent=1 // pred_check_branch
      %45 = sbr.rel (0) target = $region37
    $region36: #{tpu_custom_call.1} parent=1 // pred_region
      _
    $region37: #{tpu_custom_call.1} parent=1 // pred_fallthru
      _
    // Predicated region
    $region38: #{tpu_custom_call.1} parent=1 // pred_check
      _
    $region39: #{tpu_custom_call.1} parent=1 // pred_check_branch
      %47 = sbr.rel (0) target = $region41
    $region40: #{tpu_custom_call.1} parent=1 // pred_region
      %48 = dma.done [#allocation4], 2048
    $region41: #{tpu_custom_call.1} parent=1 // pred_fallthru
      _
    %v50 = vld [vmem:[%s0] sm:$0xf]
    %v51 = vld [vmem:[%s2] sm:$0xf]
    %v52 = vld [vmem:[%s2 + $0x4] sm:$0xf]
    %v53 = vld [vmem:[%s1] sm:$0xf]
    %v54 = vld [vmem:[%s3] sm:$0x3]
    %vm55 = vcmask 31744
    %v57 = vsel %vm55, %v53, 0
    %vm59 = vcmask 1041408
    %v61 = vsel %vm59, %v54, 0
    %63 = vmatprep.subr.bf16.mxu0 0
    %64 = vmatpush1.bf16.msra.mxu0 %v61
    %65 = vmatprep.subr.bf16.mxu0 0
    %66 = vmatpush1.bf16.msra.mxu0 0
    %67 = vmatprep.subr.bf16.mxu0 0
    %68 = vmatpush1.bf16.msra.mxu0 0
    %69 = vmatprep.subr.bf16.mxu0 0
    %70 = vmatpush1.bf16.msra.mxu0 0
    %71 = vmatprep.subr.bf16.mxu0 0
    %72 = vmatpush1.bf16.msra.mxu0 0
    %73 = vmatprep.subr.bf16.mxu0 0
    %74 = vmatpush1.bf16.msra.mxu0 0
    %75 = vmatprep.subr.bf16.mxu0 0
    %76 = vmatpush1.bf16.msra.mxu0 0
    %77 = vmatprep.subr.bf16.mxu0 0
    %78 = vmatpush1.bf16.msra.mxu0 0
    %79 = vmatprep.subr.bf16.mxu0 0
    %80 = vmatpush1.bf16.msra.mxu0 0
    %81 = vmatprep.subr.bf16.mxu0 0
    %82 = vmatpush1.bf16.msra.mxu0 0
    %83 = vmatprep.subr.bf16.mxu0 0
    %84 = vmatpush1.bf16.msra.mxu0 0
    %85 = vmatprep.subr.bf16.mxu0 0
    %86 = vmatpush1.bf16.msra.mxu0 0
    %87 = vmatprep.subr.bf16.mxu0 0
    %88 = vmatpush1.bf16.msra.mxu0 0
    %89 = vmatprep.subr.bf16.mxu0 0
    %90 = vmatpush1.bf16.msra.mxu0 0
    %91 = vmatprep.subr.bf16.mxu0 0
    %92 = vmatpush1.bf16.msra.mxu0 0
    %93 = vmatprep.subr.bf16.mxu0 0
    %94 = vmatpush1.bf16.msra.mxu0 0
    %95 = vmatprep.mubr.bf16.mxu0 0
    %96 = vmatmul.mubr.bf16.gmra.mrb[0].mxu0 %v57
    %v97 = vpop.f32.mrb[0].mxu0
    %v98 = vadd.f32 0.0, %v97
    %v99 = vpop.f32.mrb[0].mxu0
    %v100 = vpop.f32.mrb[0].mxu0
    %v101 = vpop.f32.mrb[0].mxu0
    %102 = vdwg.mxu0
    %v105 = vunpack.c.l.b16 %v51
    %v106 = vunpack.c.l.b16 %v52
    %v107 = vpack.c.b16 %v106, %v105
    %vm109 = vcmask 130048
    %v111 = vsel %vm109, %v50, 0
    %113 = vmatprep.subr.bf16.mxu0 0
    %114 = vmatpush1.bf16.msra.mxu0 %v107
    %115 = vmatprep.subr.bf16.mxu0 0
    %116 = vmatpush1.bf16.msra.mxu0 0
    %117 = vmatprep.subr.bf16.mxu0 0
    %118 = vmatpush1.bf16.msra.mxu0 0
    %119 = vmatprep.subr.bf16.mxu0 0
    %120 = vmatpush1.bf16.msra.mxu0 0
    %121 = vmatprep.subr.bf16.mxu0 0
    %122 = vmatpush1.bf16.msra.mxu0 0
    %123 = vmatprep.subr.bf16.mxu0 0
    %124 = vmatpush1.bf16.msra.mxu0 0
    %125 = vmatprep.subr.bf16.mxu0 0
    %126 = vmatpush1.bf16.msra.mxu0 0
    %127 = vmatprep.subr.bf16.mxu0 0
    %128 = vmatpush1.bf16.msra.mxu0 0
    %129 = vmatprep.subr.bf16.mxu0 0
    %130 = vmatpush1.bf16.msra.mxu0 0
    %131 = vmatprep.subr.bf16.mxu0 0
    %132 = vmatpush1.bf16.msra.mxu0 0
    %133 = vmatprep.subr.bf16.mxu0 0
    %134 = vmatpush1.bf16.msra.mxu0 0
    %135 = vmatprep.subr.bf16.mxu0 0
    %136 = vmatpush1.bf16.msra.mxu0 0
    %137 = vmatprep.subr.bf16.mxu0 0
    %138 = vmatpush1.bf16.msra.mxu0 0
    %139 = vmatprep.subr.bf16.mxu0 0
    %140 = vmatpush1.bf16.msra.mxu0 0
    %141 = vmatprep.subr.bf16.mxu0 0
    %142 = vmatpush1.bf16.msra.mxu0 0
    %143 = vmatprep.subr.bf16.mxu0 0
    %144 = vmatpush1.bf16.msra.mxu0 0
    %145 = vmatprep.mubr.bf16.mxu0 0
    %146 = vmatmul.mubr.bf16.gmra.mrb[0].mxu0 %v111
    %v147 = vpop.f32.mrb[0].mxu0
    %v148 = vadd.f32 %v98, %v147
    %v149 = vpop.f32.mrb[0].mxu0
    %v150 = vpop.f32.mrb[0].mxu0
    %v151 = vpop.f32.mrb[0].mxu0
    %152 = vdwg.mxu0
    %v153 = vld [vmem:[%s4] sm:$0x1]
    %v155 = vlaneseq
    %v156 = vshrl.u32 %v155, 7
    %v157 = vsub.s32 0, %v156
    %v158 = vrot.slane %v153, %v157
    %v160 = vadd.f32 %v148, %v158
    %v161 = vmax.f32 %v160, 0.0
    %162 = vadd.xlane.f32.xlu0 %v161
    %v163 = vpop.xlane.xlu0 %162
    %v164 = vmul.f32 %v161, %v161
    %165 = vadd.xlane.f32.xlu0 %v164
    %v166 = vpop.xlane.xlu0 %165
    %v167 = vmul.f32 %v163, 0.03125
    %v168 = vmul.f32 %v166, 0.03125
    %v169 = vmul.f32 %v167, %v167
    %v170 = vsub.f32 %v168, %v169
    %v171 = vmax.f32 %v170, 0.0
    %v172 = vsub.f32 %v161, %v167
    %v173 = vadd.f32 %v171, 1e-05
    %v174 = vrsqrt.pop %v173
    %v175 = vmul.f32 %v172, %v174
    %v176 = vpack.c.bf16 %v175, %v175
    %v177 = vld [vmem:[#allocation3] sm:$0xf]
    %v178 = vld [vmem:[#allocation3 + $0x4] sm:$0xf]
    %v179 = vld [vmem:[#allocation3 + $0x8] sm:$0xf]
    %v180 = vld [vmem:[#allocation3 + $0xc] sm:$0xf]
    %v181 = vld [vmem:[#allocation3 + $0x10] sm:$0xf]
    %v182 = vld [vmem:[#allocation3 + $0x14] sm:$0xf]
    %v183 = vld [vmem:[#allocation3 + $0x18] sm:$0xf]
    %v184 = vld [vmem:[#allocation3 + $0x1c] sm:$0xf]
    %v185 = vld [vmem:[#allocation3 + $0x20] sm:$0xf]
    %v186 = vld [vmem:[#allocation3 + $0x24] sm:$0xf]
    %v187 = vld [vmem:[#allocation3 + $0x28] sm:$0xf]
    %v188 = vld [vmem:[#allocation3 + $0x2c] sm:$0xf]
    %v189 = vld [vmem:[#allocation3 + $0x30] sm:$0xf]
    %v190 = vld [vmem:[#allocation3 + $0x34] sm:$0xf]
    %v191 = vld [vmem:[#allocation3 + $0x38] sm:$0xf]
    %v192 = vld [vmem:[#allocation3 + $0x3c] sm:$0xf]
    %v193 = vld [vmem:[%s6] sm:$0x1]
    %v195 = vlaneseq
    %v196 = vshrl.u32 %v195, 7
    %v197 = vsub.s32 0, %v196
    %v198 = vrot.slane %v193, %v197
    %v216 = vunpack.c.l.b16 %v177
    %v217 = vunpack.c.l.b16 %v178
    %v218 = vunpack.c.l.b16 %v179
    %v219 = vunpack.c.l.b16 %v180
    %v220 = vunpack.c.l.b16 %v181
    %v221 = vunpack.c.l.b16 %v182
    %v222 = vunpack.c.l.b16 %v183
    %v223 = vunpack.c.l.b16 %v184
    %v224 = vunpack.c.l.b16 %v185
    %v225 = vunpack.c.l.b16 %v186
    %v226 = vunpack.c.l.b16 %v187
    %v227 = vunpack.c.l.b16 %v188
    %v228 = vunpack.c.l.b16 %v189
    %v229 = vunpack.c.l.b16 %v190
    %v230 = vunpack.c.l.b16 %v191
    %v231 = vunpack.c.l.b16 %v192
    %v232 = vpack.c.b16 %v217, %v216
    %v233 = vpack.c.b16 %v219, %v218
    %v234 = vpack.c.b16 %v221, %v220
    %v235 = vpack.c.b16 %v223, %v222
    %v236 = vpack.c.b16 %v225, %v224
    %v237 = vpack.c.b16 %v227, %v226
    %v238 = vpack.c.b16 %v229, %v228
    %v239 = vpack.c.b16 %v231, %v230
    %248 = vmatprep.subr.bf16.mxu0 0
    %249 = vmatpush1.bf16.msra.mxu0 %v232
    %250 = vmatprep.subr.bf16.mxu0 0
    %251 = vmatpush1.bf16.msra.mxu0 %v233
    %252 = vmatprep.subr.bf16.mxu0 0
    %253 = vmatpush1.bf16.msra.mxu0 %v234
    %254 = vmatprep.subr.bf16.mxu0 0
    %255 = vmatpush1.bf16.msra.mxu0 %v235
    %256 = vmatprep.subr.bf16.mxu0 0
    %257 = vmatpush1.bf16.msra.mxu0 %v236
    %258 = vmatprep.subr.bf16.mxu0 0
    %259 = vmatpush1.bf16.msra.mxu0 %v237
    %260 = vmatprep.subr.bf16.mxu0 0
    %261 = vmatpush1.bf16.msra.mxu0 %v238
    %262 = vmatprep.subr.bf16.mxu0 0
    %263 = vmatpush1.bf16.msra.mxu0 %v239
    %264 = vmatprep.subr.bf16.mxu0 0
    %265 = vmatpush1.bf16.msra.mxu0 0
    %266 = vmatprep.subr.bf16.mxu0 0
    %267 = vmatpush1.bf16.msra.mxu0 0
    %268 = vmatprep.subr.bf16.mxu0 0
    %269 = vmatpush1.bf16.msra.mxu0 0
    %270 = vmatprep.subr.bf16.mxu0 0
    %271 = vmatpush1.bf16.msra.mxu0 0
    %272 = vmatprep.subr.bf16.mxu0 0
    %273 = vmatpush1.bf16.msra.mxu0 0
    %274 = vmatprep.subr.bf16.mxu0 0
    %275 = vmatpush1.bf16.msra.mxu0 0
    %276 = vmatprep.subr.bf16.mxu0 0
    %277 = vmatpush1.bf16.msra.mxu0 0
    %278 = vmatprep.subr.bf16.mxu0 0
    %279 = vmatpush1.bf16.msra.mxu0 0
    %280 = vmatprep.mubr.bf16.mxu0 0
    %281 = vmatmul.mubr.bf16.gmra.mrb[0].mxu0 %v176
    %v282 = vpop.f32.mrb[0].mxu0
    %v283 = vadd.f32 %v198, %v282
    %v284 = vpop.f32.mrb[0].mxu0
    %v285 = vpop.f32.mrb[0].mxu0
    %v286 = vpop.f32.mrb[0].mxu0
    %287 = vdwg.mxu0
    %v288 = vmax.f32 %v283, 0.0
    %289 = vadd.xlane.f32.xlu0 %v288
    %v290 = vpop.xlane.xlu0 %289
    %v291 = vmul.f32 %v288, %v288
    %292 = vadd.xlane.f32.xlu0 %v291
    %v293 = vpop.xlane.xlu0 %292
    %v294 = vmul.f32 %v290, 0.03125
    %v295 = vmul.f32 %v293, 0.03125
    %v296 = vmul.f32 %v294, %v294
    %v297 = vsub.f32 %v295, %v296
    %v298 = vmax.f32 %v297, 0.0
    %v299 = vsub.f32 %v288, %v294
    %v300 = vadd.f32 %v298, 1e-05
    %v301 = vrsqrt.pop %v300
    %v302 = vmul.f32 %v299, %v301
    %v303 = vpack.c.bf16 %v302, %v302
    %s304 = scalar_lea.vmem [#allocation3], 64
    %v305 = vld [vmem:[%s304] sm:$0xf]
    %v306 = vld [vmem:[%s304 + $0x4] sm:$0xf]
    %v307 = vld [vmem:[%s304 + $0x8] sm:$0xf]
    %v308 = vld [vmem:[%s304 + $0xc] sm:$0xf]
    %v309 = vld [vmem:[%s304 + $0x10] sm:$0xf]
    %v310 = vld [vmem:[%s304 + $0x14] sm:$0xf]
    %v311 = vld [vmem:[%s304 + $0x18] sm:$0xf]
    %v312 = vld [vmem:[%s304 + $0x1c] sm:$0xf]
    %v313 = vld [vmem:[%s304 + $0x20] sm:$0xf]
    %v314 = vld [vmem:[%s304 + $0x24] sm:$0xf]
    %v315 = vld [vmem:[%s304 + $0x28] sm:$0xf]
    %v316 = vld [vmem:[%s304 + $0x2c] sm:$0xf]
    %v317 = vld [vmem:[%s304 + $0x30] sm:$0xf]
    %v318 = vld [vmem:[%s304 + $0x34] sm:$0xf]
    %v319 = vld [vmem:[%s304 + $0x38] sm:$0xf]
    %v320 = vld [vmem:[%s304 + $0x3c] sm:$0xf]
    %s321 = scalar_lea.vmem %s6, 1
    %v322 = vld [vmem:[%s321] sm:$0x1]
    %v324 = vlaneseq
    %v325 = vshrl.u32 %v324, 7
    %v326 = vsub.s32 0, %v325
    %v327 = vrot.slane %v322, %v326
    %v345 = vunpack.c.l.b16 %v305
    %v346 = vunpack.c.l.b16 %v306
    %v347 = vunpack.c.l.b16 %v307
    %v348 = vunpack.c.l.b16 %v308
    %v349 = vunpack.c.l.b16 %v309
    %v350 = vunpack.c.l.b16 %v310
    %v351 = vunpack.c.l.b16 %v311
    %v352 = vunpack.c.l.b16 %v312
    %v353 = vunpack.c.l.b16 %v313
    %v354 = vunpack.c.l.b16 %v314
    %v355 = vunpack.c.l.b16 %v315
    %v356 = vunpack.c.l.b16 %v316
    %v357 = vunpack.c.l.b16 %v317
    %v358 = vunpack.c.l.b16 %v318
    %v359 = vunpack.c.l.b16 %v319
    %v360 = vunpack.c.l.b16 %v320
    %v361 = vpack.c.b16 %v346, %v345
    %v362 = vpack.c.b16 %v348, %v347
    %v363 = vpack.c.b16 %v350, %v349
    %v364 = vpack.c.b16 %v352, %v351
    %v365 = vpack.c.b16 %v354, %v353
    %v366 = vpack.c.b16 %v356, %v355
    %v367 = vpack.c.b16 %v358, %v357
    %v368 = vpack.c.b16 %v360, %v359
    %377 = vmatprep.subr.bf16.mxu0 0
    %378 = vmatpush1.bf16.msra.mxu0 %v361
    %379 = vmatprep.subr.bf16.mxu0 0
    %380 = vmatpush1.bf16.msra.mxu0 %v362
    %381 = vmatprep.subr.bf16.mxu0 0
    %382 = vmatpush1.bf16.msra.mxu0 %v363
    %383 = vmatprep.subr.bf16.mxu0 0
    %384 = vmatpush1.bf16.msra.mxu0 %v364
    %385 = vmatprep.subr.bf16.mxu0 0
    %386 = vmatpush1.bf16.msra.mxu0 %v365
    %387 = vmatprep.subr.bf16.mxu0 0
    %388 = vmatpush1.bf16.msra.mxu0 %v366
    %389 = vmatprep.subr.bf16.mxu0 0
    %390 = vmatpush1.bf16.msra.mxu0 %v367
    %391 = vmatprep.subr.bf16.mxu0 0
    %392 = vmatpush1.bf16.msra.mxu0 %v368
    %393 = vmatprep.subr.bf16.mxu0 0
    %394 = vmatpush1.bf16.msra.mxu0 0
    %395 = vmatprep.subr.bf16.mxu0 0
    %396 = vmatpush1.bf16.msra.mxu0 0
    %397 = vmatprep.subr.bf16.mxu0 0
    %398 = vmatpush1.bf16.msra.mxu0 0
    %399 = vmatprep.subr.bf16.mxu0 0
    %400 = vmatpush1.bf16.msra.mxu0 0
    %401 = vmatprep.subr.bf16.mxu0 0
    %402 = vmatpush1.bf16.msra.mxu0 0
    %403 = vmatprep.subr.bf16.mxu0 0
    %404 = vmatpush1.bf16.msra.mxu0 0
    %405 = vmatprep.subr.bf16.mxu0 0
    %406 = vmatpush1.bf16.msra.mxu0 0
    %407 = vmatprep.subr.bf16.mxu0 0
    %408 = vmatpush1.bf16.msra.mxu0 0
    %409 = vmatprep.mubr.bf16.mxu0 0
    %410 = vmatmul.mubr.bf16.gmra.mrb[0].mxu0 %v303
    %v411 = vpop.f32.mrb[0].mxu0
    %v412 = vadd.f32 %v327, %v411
    %v413 = vpop.f32.mrb[0].mxu0
    %v414 = vpop.f32.mrb[0].mxu0
    %v415 = vpop.f32.mrb[0].mxu0
    %416 = vdwg.mxu0
    %v417 = vmax.f32 %v412, 0.0
    %v418 = vld [vmem:[%s7] sm:$0x1]
    %v419 = vld [vmem:[#allocation2] sm:$0x1]
    %421 = vset.pattern.permute.xlu0 0
    %422 = vperm.xlu0 %421, %v419
    %v423 = vpop.permute.xlu0 %422
    %v425 = vlaneseq
    %v426 = vshrl.u32 %v425, 7
    %v427 = vsub.s32 0, %v426
    %v428 = vrot.slane %v423, %v427
    %429 = vmatprep.subr.mxu0 0.0
    %430 = vmatpush1.xpose.msra.mxu0 %v417
    %431 = vmatprep.subr.mxu0 0.0
    %432 = vmatpush1.xpose.msra.mxu0 0.0
    %433 = vmatprep.subr.mxu0 0.0
    %434 = vmatpush1.xpose.msra.mxu0 0.0
    %435 = vmatprep.subr.mxu0 0.0
    %436 = vmatpush1.xpose.msra.mxu0 0.0
    %437 = vmatprep.subr.mxu0 0.0
    %438 = vmatpush1.xpose.msra.mxu0 0.0
    %439 = vmatprep.subr.mxu0 0.0
    %440 = vmatpush1.xpose.msra.mxu0 0.0
    %441 = vmatprep.subr.mxu0 0.0
    %442 = vmatpush1.xpose.msra.mxu0 0.0
    %443 = vmatprep.subr.mxu0 0.0
    %444 = vmatpush1.xpose.msra.mxu0 0.0
    %445 = vmatprep.subr.mxu0 0.0
    %446 = vmatpush1.xpose.msra.mxu0 0.0
    %447 = vmatprep.subr.mxu0 0.0
    %448 = vmatpush1.xpose.msra.mxu0 0.0
    %449 = vmatprep.subr.mxu0 0.0
    %450 = vmatpush1.xpose.msra.mxu0 0.0
    %451 = vmatprep.subr.mxu0 0.0
    %452 = vmatpush1.xpose.msra.mxu0 0.0
    %453 = vmatprep.subr.mxu0 0.0
    %454 = vmatpush1.xpose.msra.mxu0 0.0
    %455 = vmatprep.subr.mxu0 0.0
    %456 = vmatpush1.xpose.msra.mxu0 0.0
    %457 = vmatprep.subr.mxu0 0.0
    %458 = vmatpush1.xpose.msra.mxu0 0.0
    %459 = vmatprep.subr.mxu0 0.0
    %460 = vmatpush1.xpose.msra.mxu0 0.0
    %461 = vmatprep.subr.mxu0 0.0
    %462 = vmatpush1.xpose.msra.mxu0 0.0
    %463 = vmatprep.subr.mxu0 0.0
    %464 = vmatpush1.xpose.msra.mxu0 0.0
    %465 = vmatprep.subr.mxu0 0.0
    %466 = vmatpush1.xpose.msra.mxu0 0.0
    %467 = vmatprep.subr.mxu0 0.0
    %468 = vmatpush1.xpose.msra.mxu0 0.0
    %469 = vmatprep.subr.mxu0 0.0
    %470 = vmatpush1.xpose.msra.mxu0 0.0
    %471 = vmatprep.subr.mxu0 0.0
    %472 = vmatpush1.xpose.msra.mxu0 0.0
    %473 = vmatprep.subr.mxu0 0.0
    %474 = vmatpush1.xpose.msra.mxu0 0.0
    %475 = vmatprep.subr.mxu0 0.0
    %476 = vmatpush1.xpose.msra.mxu0 0.0
    %477 = vmatprep.subr.mxu0 0.0
    %478 = vmatpush1.xpose.msra.mxu0 0.0
    %479 = vmatprep.subr.mxu0 0.0
    %480 = vmatpush1.xpose.msra.mxu0 0.0
    %481 = vmatprep.subr.mxu0 0.0
    %482 = vmatpush1.xpose.msra.mxu0 0.0
    %483 = vmatprep.subr.mxu0 0.0
    %484 = vmatpush1.xpose.msra.mxu0 0.0
    %485 = vmatprep.subr.mxu0 0.0
    %486 = vmatpush1.xpose.msra.mxu0 0.0
    %487 = vmatprep.subr.mxu0 0.0
    %488 = vmatpush1.xpose.msra.mxu0 0.0
    %489 = vmatprep.subr.mxu0 0.0
    %490 = vmatpush1.xpose.msra.mxu0 0.0
    %491 = vmatprep.subr.mxu0 0.0
    %492 = vmatpush1.xpose.msra.mxu0 0.0
    %493 = vmatprep.mubr.f32.mxu0 0.0
    %494 = vmatmul.mubr.f32.gmra.mrb[0].mxu0 %v418
    %v495 = vpop.f32.mrb[0].mxu0
    %v496 = vadd.f32 %v428, %v495
    %v497 = vpop.f32.mrb[0].mxu0
    %498 = vdwg.mxu0
    %vm499 = vcmask 57344
    %500 = vst.msk [vmem:[#allocation6] sm:$0x1] %vm499, %v496
    // Predicated region
    $region42: #{tpu_custom_call.1} parent=1 // pred_check
      _
    $region43: #{tpu_custom_call.1} parent=1 // pred_check_branch
      %502 = sbr.rel (0) target = $region45
    $region44: #{tpu_custom_call.1} parent=1 // pred_region
      %s504 = ssub.s32 16, 16
      %505 = vsyncadd [#allocation5], %s504
      %s507 = sshll.u32 [#allocation6], 4
      %s508 = int_to_ptr.vmem [resolvable:$true] %s507
      %510 = dma.vmem_to_hbm [thread:$0]  %s508, 16, %s9, [#allocation5]
    $region45: #{tpu_custom_call.1} parent=1 // pred_fallthru
      _
    // Predicated region
    $region46: #{tpu_custom_call.1} parent=1 // pred_check
      _
    $region47: #{tpu_custom_call.1} parent=1 // pred_check_branch
      %512 = sbr.rel (0) target = $region49
    $region48: #{tpu_custom_call.1} parent=1 // pred_region
      %513 = dma.done [#allocation5], 16
    $region49: #{tpu_custom_call.1} parent=1 // pred_fallthru
      _
    %514 = vsyncpa [#allocation4], 1
    %515 = vsyncpa [#allocation5], 1

</llo_original>
